<compile_context>
chip_gen: v7x
topology: tpu7x:2x2x1
jax: 0.10.0
libtpu: 0.0.40
codegen_flags: <defaults>
</compile_context>

<pallas_src>
import functools

import jax
import jax.numpy as jnp
from jax import lax
from jax.experimental import pallas as pl
from jax.experimental.pallas import tpu as pltpu


def _prenorm_conv3d_kernel(x_ref, w_ref, b_ref, o_ref, *,
                           D, H, W, Cin, Cin_p, Cout, eps, slope, compute_dtype):
    """One grid step = one batch element (channels on sublanes, flat DHW on lanes).

    x_ref: (Cin, DHW)           f32 input (unpadded channels)
    w_ref: (3, Cout, 9*Cin_p)   compute_dtype im2col weights, one chunk per kd
    b_ref: (Cout, 1)            f32 bias
    o_ref: (Cout, DHW)          output block (lane-dense)
    """
    DHW = D * H * W
    HW = H * W

    x = x_ref[...].astype(jnp.float32)                       # (Cin, DHW)

    # ---- InstanceNorm3d: two-pass mean / biased variance, lane-dense reduce ----
    inv_n = 1.0 / DHW
    mean = jnp.sum(x, axis=1, keepdims=True) * inv_n          # (Cin, 1)
    xc = x - mean
    var = jnp.sum(xc * xc, axis=1, keepdims=True) * inv_n
    y = xc * lax.rsqrt(var + eps)

    # ---- LeakyReLU(negative_slope=slope) ----
    y = jnp.where(y >= 0, y, slope * y)

    # Pad channels to the 8-sublane tile in-register (zero rows x zero weights).
    if Cin_p > Cin:
        y = jnp.concatenate(
            [y, jnp.zeros((Cin_p - Cin, DHW), jnp.float32)], axis=0)

    # ---- boundary masks from a lane iota (zero HBM mask traffic) ----
    # flat lane p = d*HW + h*W + w; decompose with exact f32 arithmetic
    # (values < 2^24, +0.5 keeps floor away from integer boundaries).
    lane = lax.broadcasted_iota(jnp.int32, (1, DHW), 1).astype(jnp.float32)
    d_c = jnp.floor((lane + 0.5) / HW)
    rem = lane - d_c * HW
    h_c = jnp.floor((rem + 0.5) / W)
    w_c = rem - h_c * W

    def axis_masks(coord, size):
        # validity of source coordinate (coord + k - 1) for tap offsets k=0,1,2;
        # None == always valid (center tap) -> skip the multiply entirely.
        return [(coord >= 1.0).astype(jnp.float32), None,
                (coord <= float(size - 2)).astype(jnp.float32)]

    dm = axis_masks(d_c, D)
    hm = axis_masks(h_c, H)
    wm = axis_masks(w_c, W)

    def combine(a, b):
        if a is None:
            return b
        if b is None:
            return a
        return a * b

    # ---- Conv3d as 3 chunked im2col matmuls (one per kd), f32 accumulation ----
    # Zero 'same' padding = circular lane-roll + {0,1} mask; chunking keeps the
    # in-flight patch at 9*Cin_p rows (vs 27x) and the rows are compute_dtype
    # (bf16 by default) for native MXU rate.
    acc = jnp.zeros((Cout, DHW), jnp.float32)
    for kd in range(3):
        rows = []
        for kh in range(3):
            m_dh = combine(dm[kd], hm[kh])
            for kw in range(3):
                m = combine(m_dh, wm[kw])
                s = (kd - 1) * HW + (kh - 1) * W + (kw - 1)    # flat source offset
                shifted = y if s == 0 else pltpu.roll(y, (-s) % DHW, axis=1)
                rows.append(shifted if m is None else shifted * m)
        chunk = jnp.concatenate(rows, axis=0).astype(compute_dtype)  # (9*Cin_p, DHW)
        acc = acc + jnp.dot(w_ref[kd], chunk,
                            preferred_element_type=jnp.float32)      # (Cout, DHW)

    o_ref[...] = (acc + b_ref[...]).astype(o_ref.dtype)       # lane-dense store


def general_conv3d_prenorm_forward(x_ncdhw, w_oidhw, bias, *, eps=1e-5, slope=0.2,
                                   compute_dtype=jnp.bfloat16):
    """x: (N, Cin, D, H, W); w: (Cout, Cin, 3, 3, 3); bias: (Cout,). Returns NCDHW."""
    N, Cin, D, H, W = x_ncdhw.shape
    Cout = w_oidhw.shape[0]
    DHW = D * H * W
    Cin_p = ((Cin + 7) // 8) * 8

    # Flatten spatial dims only (free contiguous collapse) -- no host-side channel
    # pad of x (that would cost a full extra HBM pass); padding is done in-kernel.
    x2 = x_ncdhw.reshape(N, Cin, DHW)

    # (Cout, Cin, 3,3,3) -> (3, Cout, 9*Cin_p): per-kd chunk, tap-major / channel-minor;
    # padded channels carry zero weights (and zero activations in-kernel).
    w_p = jnp.pad(w_oidhw, ((0, 0), (0, Cin_p - Cin), (0, 0), (0, 0), (0, 0)))
    w2 = jnp.transpose(w_p, (2, 0, 3, 4, 1)).reshape(3, Cout, 9 * Cin_p)
    w2 = w2.astype(compute_dtype)
    b2 = bias.reshape(Cout, 1).astype(jnp.float32)

    kernel = functools.partial(
        _prenorm_conv3d_kernel, D=D, H=H, W=W, Cin=Cin, Cin_p=Cin_p, Cout=Cout,
        eps=eps, slope=slope, compute_dtype=compute_dtype)

    # TODO(synk): for real volumes where (Cin+Cout)*DHW*4B*2buf exceeds scoped VMEM
    # (32 MiB default; halve any v6e-derived tile for v7x's 64 MiB physical), add a
    # D-slab grid axis ("arbitrary") with a 1-slab halo, keeping the lane extent a
    # multiple of 128 (>=512); also consider pl.Buffered(1) on the constant-index
    # w/b operands once Cout grows, and folding N into the lane axis when N==1.
    out = pl.pallas_call(
        kernel,
        out_shape=jax.ShapeDtypeStruct((N, Cout, DHW), x_ncdhw.dtype),
        grid_spec=pltpu.PrefetchScalarGridSpec(
            num_scalar_prefetch=0,
            grid=(N,),
            in_specs=[
                pl.BlockSpec((None, Cin, DHW), lambda n: (n, 0, 0)),
                pl.BlockSpec((3, Cout, 9 * Cin_p), lambda n: (0, 0, 0)),
                pl.BlockSpec((Cout, 1), lambda n: (0, 0)),
            ],
            out_specs=pl.BlockSpec((None, Cout, DHW), lambda n: (n, 0, 0)),
        ),
        compiler_params=pltpu.CompilerParams(
            dimension_semantics=("parallel",)),   # one batch per TC on v7x
    )(x2, w2, b2)

    return out.reshape(N, Cout, D, H, W)


def _reference(x, w, b, eps=1e-5, slope=0.2):
    """Pure-JAX reference matching the PyTorch module (NCDHW)."""
    mean = jnp.mean(x, axis=(2, 3, 4), keepdims=True)
    var = jnp.mean((x - mean) ** 2, axis=(2, 3, 4), keepdims=True)
    y = (x - mean) * lax.rsqrt(var + eps)
    y = jnp.where(y >= 0, y, slope * y)
    out = lax.conv_general_dilated(
        y, w, window_strides=(1, 1, 1),
        padding=((1, 1), (1, 1), (1, 1)),
        dimension_numbers=("NCDHW", "OIDHW", "NCDHW"),
        precision=lax.Precision.HIGHEST)
    return out + b.reshape(1, -1, 1, 1, 1)


if __name__ == "__main__":
    N, in_ch, out_ch = 2, 4, 8
    D = H = W = 8

    key = jax.random.PRNGKey(0)
    kx, kw, kb = jax.random.split(key, 3)

    x = jax.random.normal(kx, (N, in_ch, D, H, W), dtype=jnp.float32)
    # Deterministic synthetic Conv3d parameters (weight: (out, in, kD, kH, kW)).
    fan_in = in_ch * 3 * 3 * 3
    bound = 1.0 / (fan_in ** 0.5)
    w = jax.random.uniform(kw, (out_ch, in_ch, 3, 3, 3),
                           minval=-bound, maxval=bound, dtype=jnp.float32)
    b = jax.random.uniform(kb, (out_ch,),
                           minval=-bound, maxval=bound, dtype=jnp.float32)

    ref = _reference(x, w, b)

    # Strict numerical check with the f32 MXU path.
    out_f32 = jax.block_until_ready(
        general_conv3d_prenorm_forward(x, w, b, compute_dtype=jnp.float32))
    assert out_f32.shape == (N, out_ch, D, H, W), out_f32.shape
    assert jnp.allclose(out_f32, ref, atol=1e-4, rtol=1e-4), (
        float(jnp.max(jnp.abs(out_f32 - ref))))

    # Default perf path: bf16 im2col rows / weights, f32 accumulation.
    out_bf16 = jax.block_until_ready(general_conv3d_prenorm_forward(x, w, b))
    assert out_bf16.shape == (N, out_ch, D, H, W), out_bf16.shape
    assert jnp.allclose(out_bf16, ref, atol=5e-2, rtol=5e-2), (
        float(jnp.max(jnp.abs(out_bf16 - ref))))

    print("KERNEL_OK")
</pallas_src>

<mosaic_0001>
module attributes {stable_mosaic.version = 11 : i64} {
  func.func @_prenorm_conv3d_kernel(%arg0: i32, %arg1: memref<1x4x512xf32, #tpu.memory_space<vmem>>, %arg2: memref<3x8x72xf32, #tpu.memory_space<vmem>>, %arg3: memref<8x1xf32, #tpu.memory_space<vmem>>, %arg4: memref<1x8x512xf32, #tpu.memory_space<vmem>>) attributes {dimension_semantics = [#tpu.dimension_semantics<parallel>], iteration_bounds = array<i64: 2>, scalar_prefetch = 0 : i64, scratch_operands = 0 : i64, tpu.core_type = #tpu.core_type<tc>, window_params = [{transform_indices = @transform_0, window_bounds = array<i64: 1, 4, 512>}, {pipeline_mode = #tpu.pipeline_mode<synchronous>, transform_indices = @transform_1, window_bounds = array<i64: 3, 8, 72>}, {pipeline_mode = #tpu.pipeline_mode<synchronous>, transform_indices = @transform_2, window_bounds = array<i64: 8, 1>}, {transform_indices = @transform_3, window_bounds = array<i64: 1, 8, 512>}]} {
    %c0 = arith.constant 0 : index
    %c0_0 = arith.constant 0 : index
    %c0_1 = arith.constant 0 : index
    %0 = vector.load %arg1[%c0, %c0_0, %c0_1] : memref<1x4x512xf32, #tpu.memory_space<vmem>>, vector<1x4x512xf32>
    %1 = vector.shape_cast %0 : vector<1x4x512xf32> to vector<4x512xf32>
    %cst = arith.constant dense<0.000000e+00> : vector<4xf32>
    %2 = vector.multi_reduction <add>, %1, %cst [1] : vector<4x512xf32> to vector<4xf32>
    %3 = vector.shape_cast %2 : vector<4xf32> to vector<4x1xf32>
    %cst_2 = arith.constant 0.001953125 : f32
    %4 = vector.broadcast %cst_2 : f32 to vector<4x1xf32>
    %5 = arith.mulf %3, %4 : vector<4x1xf32>
    %6 = vector.broadcast %5 : vector<4x1xf32> to vector<4x512xf32>
    %7 = arith.subf %1, %6 : vector<4x512xf32>
    %8 = arith.mulf %7, %7 : vector<4x512xf32>
    %cst_3 = arith.constant dense<0.000000e+00> : vector<4xf32>
    %9 = vector.multi_reduction <add>, %8, %cst_3 [1] : vector<4x512xf32> to vector<4xf32>
    %10 = vector.shape_cast %9 : vector<4xf32> to vector<4x1xf32>
    %cst_4 = arith.constant 0.001953125 : f32
    %11 = vector.broadcast %cst_4 : f32 to vector<4x1xf32>
    %12 = arith.mulf %10, %11 : vector<4x1xf32>
    %cst_5 = arith.constant 9.99999974E-6 : f32
    %13 = vector.broadcast %cst_5 : f32 to vector<4x1xf32>
    %14 = arith.addf %12, %13 : vector<4x1xf32>
    %15 = math.rsqrt %14 : vector<4x1xf32>
    %16 = vector.broadcast %15 : vector<4x1xf32> to vector<4x512xf32>
    %17 = arith.mulf %7, %16 : vector<4x512xf32>
    %cst_6 = arith.constant 0.000000e+00 : f32
    %18 = vector.broadcast %cst_6 : f32 to vector<4x512xf32>
    %19 = arith.cmpf oge, %17, %18 : vector<4x512xf32>
    %cst_7 = arith.constant 2.000000e-01 : f32
    %20 = vector.broadcast %cst_7 : f32 to vector<4x512xf32>
    %21 = arith.mulf %20, %17 : vector<4x512xf32>
    %22 = arith.select %19, %17, %21 : vector<4x512xi1>, vector<4x512xf32>
    %cst_8 = arith.constant 0.000000e+00 : f32
    %23 = vector.broadcast %cst_8 : f32 to vector<4x512xf32>
    %24 = tpu.concatenate %22, %23 in 0 : vector<4x512xf32>, vector<4x512xf32> -> vector<8x512xf32>
    %25 = tpu.iota {dimensions = array<i32: 1>} : vector<1x512xi32>
    %26 = arith.sitofp %25 : vector<1x512xi32> to vector<1x512xf32>
    %cst_9 = arith.constant 5.000000e-01 : f32
    %27 = vector.broadcast %cst_9 : f32 to vector<1x512xf32>
    %28 = arith.addf %26, %27 : vector<1x512xf32>
    %cst_10 = arith.constant 6.400000e+01 : f32
    %29 = vector.broadcast %cst_10 : f32 to vector<1x512xf32>
    %30 = arith.divf %28, %29 : vector<1x512xf32>
    %31 = math.floor %30 : vector<1x512xf32>
    %cst_11 = arith.constant 6.400000e+01 : f32
    %32 = vector.broadcast %cst_11 : f32 to vector<1x512xf32>
    %33 = arith.mulf %31, %32 : vector<1x512xf32>
    %34 = arith.subf %26, %33 : vector<1x512xf32>
    %cst_12 = arith.constant 5.000000e-01 : f32
    %35 = vector.broadcast %cst_12 : f32 to vector<1x512xf32>
    %36 = arith.addf %34, %35 : vector<1x512xf32>
    %cst_13 = arith.constant 8.000000e+00 : f32
    %37 = vector.broadcast %cst_13 : f32 to vector<1x512xf32>
    %38 = arith.divf %36, %37 : vector<1x512xf32>
    %39 = math.floor %38 : vector<1x512xf32>
    %cst_14 = arith.constant 8.000000e+00 : f32
    %40 = vector.broadcast %cst_14 : f32 to vector<1x512xf32>
    %41 = arith.mulf %39, %40 : vector<1x512xf32>
    %42 = arith.subf %34, %41 : vector<1x512xf32>
    %cst_15 = arith.constant 1.000000e+00 : f32
    %43 = vector.broadcast %cst_15 : f32 to vector<1x512xf32>
    %44 = arith.cmpf oge, %31, %43 : vector<1x512xf32>
    %45 = arith.extui %44 : vector<1x512xi1> to vector<1x512xi32>
    %46 = arith.sitofp %45 : vector<1x512xi32> to vector<1x512xf32>
    %cst_16 = arith.constant 6.000000e+00 : f32
    %47 = vector.broadcast %cst_16 : f32 to vector<1x512xf32>
    %48 = arith.cmpf ole, %31, %47 : vector<1x512xf32>
    %49 = arith.extui %48 : vector<1x512xi1> to vector<1x512xi32>
    %50 = arith.sitofp %49 : vector<1x512xi32> to vector<1x512xf32>
    %cst_17 = arith.constant 1.000000e+00 : f32
    %51 = vector.broadcast %cst_17 : f32 to vector<1x512xf32>
    %52 = arith.cmpf oge, %39, %51 : vector<1x512xf32>
    %53 = arith.extui %52 : vector<1x512xi1> to vector<1x512xi32>
    %54 = arith.sitofp %53 : vector<1x512xi32> to vector<1x512xf32>
    %cst_18 = arith.constant 6.000000e+00 : f32
    %55 = vector.broadcast %cst_18 : f32 to vector<1x512xf32>
    %56 = arith.cmpf ole, %39, %55 : vector<1x512xf32>
    %57 = arith.extui %56 : vector<1x512xi1> to vector<1x512xi32>
    %58 = arith.sitofp %57 : vector<1x512xi32> to vector<1x512xf32>
    %cst_19 = arith.constant 1.000000e+00 : f32
    %59 = vector.broadcast %cst_19 : f32 to vector<1x512xf32>
    %60 = arith.cmpf oge, %42, %59 : vector<1x512xf32>
    %61 = arith.extui %60 : vector<1x512xi1> to vector<1x512xi32>
    %62 = arith.sitofp %61 : vector<1x512xi32> to vector<1x512xf32>
    %cst_20 = arith.constant 6.000000e+00 : f32
    %63 = vector.broadcast %cst_20 : f32 to vector<1x512xf32>
    %64 = arith.cmpf ole, %42, %63 : vector<1x512xf32>
    %65 = arith.extui %64 : vector<1x512xi1> to vector<1x512xi32>
    %66 = arith.sitofp %65 : vector<1x512xi32> to vector<1x512xf32>
    %cst_21 = arith.constant 0.000000e+00 : f32
    %67 = vector.broadcast %cst_21 : f32 to vector<8x512xf32>
    %68 = arith.mulf %46, %54 : vector<1x512xf32>
    %69 = arith.mulf %68, %62 : vector<1x512xf32>
    %c73_i32 = arith.constant 73 : i32
    %70 = tpu.dynamic_rotate %24 by %c73_i32 dim 1 : vector<8x512xf32>, i32 -> vector<8x512xf32>
    %71 = vector.broadcast %69 : vector<1x512xf32> to vector<8x512xf32>
    %72 = arith.mulf %70, %71 : vector<8x512xf32>
    %c72_i32 = arith.constant 72 : i32
    %73 = tpu.dynamic_rotate %24 by %c72_i32 dim 1 : vector<8x512xf32>, i32 -> vector<8x512xf32>
    %74 = vector.broadcast %68 : vector<1x512xf32> to vector<8x512xf32>
    %75 = arith.mulf %73, %74 : vector<8x512xf32>
    %76 = arith.mulf %68, %66 : vector<1x512xf32>
    %c71_i32 = arith.constant 71 : i32
    %77 = tpu.dynamic_rotate %24 by %c71_i32 dim 1 : vector<8x512xf32>, i32 -> vector<8x512xf32>
    %78 = vector.broadcast %76 : vector<1x512xf32> to vector<8x512xf32>
    %79 = arith.mulf %77, %78 : vector<8x512xf32>
    %80 = arith.mulf %46, %62 : vector<1x512xf32>
    %c65_i32 = arith.constant 65 : i32
    %81 = tpu.dynamic_rotate %24 by %c65_i32 dim 1 : vector<8x512xf32>, i32 -> vector<8x512xf32>
    %82 = vector.broadcast %80 : vector<1x512xf32> to vector<8x512xf32>
    %83 = arith.mulf %81, %82 : vector<8x512xf32>
    %c64_i32 = arith.constant 64 : i32
    %84 = tpu.dynamic_rotate %24 by %c64_i32 dim 1 : vector<8x512xf32>, i32 -> vector<8x512xf32>
    %85 = vector.broadcast %46 : vector<1x512xf32> to vector<8x512xf32>
    %86 = arith.mulf %84, %85 : vector<8x512xf32>
    %87 = arith.mulf %46, %66 : vector<1x512xf32>
    %c63_i32 = arith.constant 63 : i32
    %88 = tpu.dynamic_rotate %24 by %c63_i32 dim 1 : vector<8x512xf32>, i32 -> vector<8x512xf32>
    %89 = vector.broadcast %87 : vector<1x512xf32> to vector<8x512xf32>
    %90 = arith.mulf %88, %89 : vector<8x512xf32>
    %91 = arith.mulf %46, %58 : vector<1x512xf32>
    %92 = arith.mulf %91, %62 : vector<1x512xf32>
    %c57_i32 = arith.constant 57 : i32
    %93 = tpu.dynamic_rotate %24 by %c57_i32 dim 1 : vector<8x512xf32>, i32 -> vector<8x512xf32>
    %94 = vector.broadcast %92 : vector<1x512xf32> to vector<8x512xf32>
    %95 = arith.mulf %93, %94 : vector<8x512xf32>
    %c56_i32 = arith.constant 56 : i32
    %96 = tpu.dynamic_rotate %24 by %c56_i32 dim 1 : vector<8x512xf32>, i32 -> vector<8x512xf32>
    %97 = vector.broadcast %91 : vector<1x512xf32> to vector<8x512xf32>
    %98 = arith.mulf %96, %97 : vector<8x512xf32>
    %99 = arith.mulf %91, %66 : vector<1x512xf32>
    %c55_i32 = arith.constant 55 : i32
    %100 = tpu.dynamic_rotate %24 by %c55_i32 dim 1 : vector<8x512xf32>, i32 -> vector<8x512xf32>
    %101 = vector.broadcast %99 : vector<1x512xf32> to vector<8x512xf32>
    %102 = arith.mulf %100, %101 : vector<8x512xf32>
    %103 = tpu.concatenate %72, %75, %79, %83, %86, %90, %95, %98, %102 in 0 : vector<8x512xf32>, vector<8x512xf32>, vector<8x512xf32>, vector<8x512xf32>, vector<8x512xf32>, vector<8x512xf32>, vector<8x512xf32>, vector<8x512xf32>, vector<8x512xf32> -> vector<72x512xf32>
    %c0_22 = arith.constant 0 : index
    %c0_23 = arith.constant 0 : index
    %c0_24 = arith.constant 0 : index
    %104 = vector.load %arg2[%c0_22, %c0_23, %c0_24] : memref<3x8x72xf32, #tpu.memory_space<vmem>>, vector<1x8x72xf32>
    %105 = vector.shape_cast %104 : vector<1x8x72xf32> to vector<8x72xf32>
    %cst_25 = arith.constant dense<0.000000e+00> : vector<8x512xf32>
    %106 = tpu.matmul %105, %103, %cst_25 {dimension_numbers = #tpu.dot_dimension_numbers<[1], [0], [0], [1], [0, 0, 1, 1], [], []>} : vector<8x72xf32>, vector<72x512xf32>, vector<8x512xf32> -> vector<8x512xf32>
    %107 = arith.addf %67, %106 : vector<8x512xf32>
    %108 = arith.mulf %54, %62 : vector<1x512xf32>
    %c9_i32 = arith.constant 9 : i32
    %109 = tpu.dynamic_rotate %24 by %c9_i32 dim 1 : vector<8x512xf32>, i32 -> vector<8x512xf32>
    %110 = vector.broadcast %108 : vector<1x512xf32> to vector<8x512xf32>
    %111 = arith.mulf %109, %110 : vector<8x512xf32>
    %c8_i32 = arith.constant 8 : i32
    %112 = tpu.dynamic_rotate %24 by %c8_i32 dim 1 : vector<8x512xf32>, i32 -> vector<8x512xf32>
    %113 = vector.broadcast %54 : vector<1x512xf32> to vector<8x512xf32>
    %114 = arith.mulf %112, %113 : vector<8x512xf32>
    %115 = arith.mulf %54, %66 : vector<1x512xf32>
    %c7_i32 = arith.constant 7 : i32
    %116 = tpu.dynamic_rotate %24 by %c7_i32 dim 1 : vector<8x512xf32>, i32 -> vector<8x512xf32>
    %117 = vector.broadcast %115 : vector<1x512xf32> to vector<8x512xf32>
    %118 = arith.mulf %116, %117 : vector<8x512xf32>
    %c1_i32 = arith.constant 1 : i32
    %119 = tpu.dynamic_rotate %24 by %c1_i32 dim 1 : vector<8x512xf32>, i32 -> vector<8x512xf32>
    %120 = vector.broadcast %62 : vector<1x512xf32> to vector<8x512xf32>
    %121 = arith.mulf %119, %120 : vector<8x512xf32>
    %c511_i32 = arith.constant 511 : i32
    %122 = tpu.dynamic_rotate %24 by %c511_i32 dim 1 : vector<8x512xf32>, i32 -> vector<8x512xf32>
    %123 = vector.broadcast %66 : vector<1x512xf32> to vector<8x512xf32>
    %124 = arith.mulf %122, %123 : vector<8x512xf32>
    %125 = arith.mulf %58, %62 : vector<1x512xf32>
    %c505_i32 = arith.constant 505 : i32
    %126 = tpu.dynamic_rotate %24 by %c505_i32 dim 1 : vector<8x512xf32>, i32 -> vector<8x512xf32>
    %127 = vector.broadcast %125 : vector<1x512xf32> to vector<8x512xf32>
    %128 = arith.mulf %126, %127 : vector<8x512xf32>
    %c504_i32 = arith.constant 504 : i32
    %129 = tpu.dynamic_rotate %24 by %c504_i32 dim 1 : vector<8x512xf32>, i32 -> vector<8x512xf32>
    %130 = vector.broadcast %58 : vector<1x512xf32> to vector<8x512xf32>
    %131 = arith.mulf %129, %130 : vector<8x512xf32>
    %132 = arith.mulf %58, %66 : vector<1x512xf32>
    %c503_i32 = arith.constant 503 : i32
    %133 = tpu.dynamic_rotate %24 by %c503_i32 dim 1 : vector<8x512xf32>, i32 -> vector<8x512xf32>
    %134 = vector.broadcast %132 : vector<1x512xf32> to vector<8x512xf32>
    %135 = arith.mulf %133, %134 : vector<8x512xf32>
    %136 = tpu.concatenate %111, %114, %118, %121, %24, %124, %128, %131, %135 in 0 : vector<8x512xf32>, vector<8x512xf32>, vector<8x512xf32>, vector<8x512xf32>, vector<8x512xf32>, vector<8x512xf32>, vector<8x512xf32>, vector<8x512xf32>, vector<8x512xf32> -> vector<72x512xf32>
    %c1 = arith.constant 1 : index
    %c0_26 = arith.constant 0 : index
    %c0_27 = arith.constant 0 : index
    %137 = vector.load %arg2[%c1, %c0_26, %c0_27] : memref<3x8x72xf32, #tpu.memory_space<vmem>>, vector<1x8x72xf32>
    %138 = vector.shape_cast %137 : vector<1x8x72xf32> to vector<8x72xf32>
    %cst_28 = arith.constant dense<0.000000e+00> : vector<8x512xf32>
    %139 = tpu.matmul %138, %136, %cst_28 {dimension_numbers = #tpu.dot_dimension_numbers<[1], [0], [0], [1], [0, 0, 1, 1], [], []>} : vector<8x72xf32>, vector<72x512xf32>, vector<8x512xf32> -> vector<8x512xf32>
    %140 = arith.addf %107, %139 : vector<8x512xf32>
    %141 = arith.mulf %50, %54 : vector<1x512xf32>
    %142 = arith.mulf %141, %62 : vector<1x512xf32>
    %c457_i32 = arith.constant 457 : i32
    %143 = tpu.dynamic_rotate %24 by %c457_i32 dim 1 : vector<8x512xf32>, i32 -> vector<8x512xf32>
    %144 = vector.broadcast %142 : vector<1x512xf32> to vector<8x512xf32>
    %145 = arith.mulf %143, %144 : vector<8x512xf32>
    %c456_i32 = arith.constant 456 : i32
    %146 = tpu.dynamic_rotate %24 by %c456_i32 dim 1 : vector<8x512xf32>, i32 -> vector<8x512xf32>
    %147 = vector.broadcast %141 : vector<1x512xf32> to vector<8x512xf32>
    %148 = arith.mulf %146, %147 : vector<8x512xf32>
    %149 = arith.mulf %141, %66 : vector<1x512xf32>
    %c455_i32 = arith.constant 455 : i32
    %150 = tpu.dynamic_rotate %24 by %c455_i32 dim 1 : vector<8x512xf32>, i32 -> vector<8x512xf32>
    %151 = vector.broadcast %149 : vector<1x512xf32> to vector<8x512xf32>
    %152 = arith.mulf %150, %151 : vector<8x512xf32>
    %153 = arith.mulf %50, %62 : vector<1x512xf32>
    %c449_i32 = arith.constant 449 : i32
    %154 = tpu.dynamic_rotate %24 by %c449_i32 dim 1 : vector<8x512xf32>, i32 -> vector<8x512xf32>
    %155 = vector.broadcast %153 : vector<1x512xf32> to vector<8x512xf32>
    %156 = arith.mulf %154, %155 : vector<8x512xf32>
    %c448_i32 = arith.constant 448 : i32
    %157 = tpu.dynamic_rotate %24 by %c448_i32 dim 1 : vector<8x512xf32>, i32 -> vector<8x512xf32>
    %158 = vector.broadcast %50 : vector<1x512xf32> to vector<8x512xf32>
    %159 = arith.mulf %157, %158 : vector<8x512xf32>
    %160 = arith.mulf %50, %66 : vector<1x512xf32>
    %c447_i32 = arith.constant 447 : i32
    %161 = tpu.dynamic_rotate %24 by %c447_i32 dim 1 : vector<8x512xf32>, i32 -> vector<8x512xf32>
    %162 = vector.broadcast %160 : vector<1x512xf32> to vector<8x512xf32>
    %163 = arith.mulf %161, %162 : vector<8x512xf32>
    %164 = arith.mulf %50, %58 : vector<1x512xf32>
    %165 = arith.mulf %164, %62 : vector<1x512xf32>
    %c441_i32 = arith.constant 441 : i32
    %166 = tpu.dynamic_rotate %24 by %c441_i32 dim 1 : vector<8x512xf32>, i32 -> vector<8x512xf32>
    %167 = vector.broadcast %165 : vector<1x512xf32> to vector<8x512xf32>
    %168 = arith.mulf %166, %167 : vector<8x512xf32>
    %c440_i32 = arith.constant 440 : i32
    %169 = tpu.dynamic_rotate %24 by %c440_i32 dim 1 : vector<8x512xf32>, i32 -> vector<8x512xf32>
    %170 = vector.broadcast %164 : vector<1x512xf32> to vector<8x512xf32>
    %171 = arith.mulf %169, %170 : vector<8x512xf32>
    %172 = arith.mulf %164, %66 : vector<1x512xf32>
    %c439_i32 = arith.constant 439 : i32
    %173 = tpu.dynamic_rotate %24 by %c439_i32 dim 1 : vector<8x512xf32>, i32 -> vector<8x512xf32>
    %174 = vector.broadcast %172 : vector<1x512xf32> to vector<8x512xf32>
    %175 = arith.mulf %173, %174 : vector<8x512xf32>
    %176 = tpu.concatenate %145, %148, %152, %156, %159, %163, %168, %171, %175 in 0 : vector<8x512xf32>, vector<8x512xf32>, vector<8x512xf32>, vector<8x512xf32>, vector<8x512xf32>, vector<8x512xf32>, vector<8x512xf32>, vector<8x512xf32>, vector<8x512xf32> -> vector<72x512xf32>
    %c2 = arith.constant 2 : index
    %c0_29 = arith.constant 0 : index
    %c0_30 = arith.constant 0 : index
    %177 = vector.load %arg2[%c2, %c0_29, %c0_30] : memref<3x8x72xf32, #tpu.memory_space<vmem>>, vector<1x8x72xf32>
    %178 = vector.shape_cast %177 : vector<1x8x72xf32> to vector<8x72xf32>
    %cst_31 = arith.constant dense<0.000000e+00> : vector<8x512xf32>
    %179 = tpu.matmul %178, %176, %cst_31 {dimension_numbers = #tpu.dot_dimension_numbers<[1], [0], [0], [1], [0, 0, 1, 1], [], []>} : vector<8x72xf32>, vector<72x512xf32>, vector<8x512xf32> -> vector<8x512xf32>
    %180 = arith.addf %140, %179 : vector<8x512xf32>
    %c0_32 = arith.constant 0 : index
    %c0_33 = arith.constant 0 : index
    %181 = vector.load %arg3[%c0_32, %c0_33] : memref<8x1xf32, #tpu.memory_space<vmem>>, vector<8x1xf32>
    %182 = vector.broadcast %181 : vector<8x1xf32> to vector<8x512xf32>
    %183 = arith.addf %180, %182 : vector<8x512xf32>
    %c0_34 = arith.constant 0 : index
    %c0_35 = arith.constant 0 : index
    %c0_36 = arith.constant 0 : index
    %184 = vector.load %arg4[%c0_34, %c0_35, %c0_36] : memref<1x8x512xf32, #tpu.memory_space<vmem>>, vector<1x8x512xf32>
    %185 = vector.shape_cast %184 : vector<1x8x512xf32> to vector<8x512xf32>
    %186 = vector.shape_cast %183 : vector<8x512xf32> to vector<1x8x512xf32>
    tpu.vector_store %arg4[%c0_34, %c0_35, %c0_36], %186 {strides = array<i32>} : memref<1x8x512xf32, #tpu.memory_space<vmem>>, vector<1x8x512xf32>,
    return
  }
  func.func @transform_0(%arg0: i32) -> (i32, i32, i32) {
    %c0_i32 = arith.constant 0 : i32
    %c0_i32_0 = arith.constant 0 : i32
    %c0_i32_1 = arith.constant 0 : i32
    return %arg0, %c0_i32, %c0_i32_0 : i32, i32, i32
  }
  func.func @transform_1(%arg0: i32) -> (i32, i32, i32) {
    %c0_i32 = arith.constant 0 : i32
    %c0_i32_0 = arith.constant 0 : i32
    %c0_i32_1 = arith.constant 0 : i32
    %c0_i32_2 = arith.constant 0 : i32
    return %c0_i32, %c0_i32_0, %c0_i32_1 : i32, i32, i32
  }
  func.func @transform_2(%arg0: i32) -> (i32, i32) {
    %c0_i32 = arith.constant 0 : i32
    %c0_i32_0 = arith.constant 0 : i32
    %c0_i32_1 = arith.constant 0 : i32
    return %c0_i32, %c0_i32_0 : i32, i32
  }
  func.func @transform_3(%arg0: i32) -> (i32, i32, i32) {
    %c0_i32 = arith.constant 0 : i32
    %c0_i32_0 = arith.constant 0 : i32
    %c0_i32_1 = arith.constant 0 : i32
    return %arg0, %c0_i32, %c0_i32_0 : i32, i32, i32
  }
}

</mosaic_0001>

<llo_original>
// kernel: tpu_custom_call.1
$region0: #{tpu_custom_call.1}
  #allocation0 [shape = 'u32[]', space=smem, size = 0x4, offset = 0x4, fixed_abs, tag = 'smem constant byte address 0x4 - core index']
  #allocation1 [shape = 'u32[144,128]{1,0:T(1,128)}', space=vmem, size = 0x12000, scoped, tag = 'internal scratch']
  %s0 = inlined_call_operand.hbm [shape: f32[2,4,512], index: 0, kind: input, shape index: {}]
  %s1 = inlined_call_operand.hbm [shape: f32[3,8,72], index: 1, kind: input, shape index: {}]
  %s2 = inlined_call_operand.vmem [shape: f32[8,1], index: 2, kind: input, shape index: {}]
  %s3 = inlined_call_operand.hbm [shape: f32[2,8,512], index: 3, kind: output, shape index: {}]
  %s4 = sld [smem:[#allocation0]]
  $region53: #{tpu_custom_call.1} parent=0
    _
  %s6 = ssub.s32 1, %s4
  %s7 = scalar_select 0, %s6, %s4
  $region1: #{tpu_custom_call.1} parent=0
    #allocation2 [shape = 'u8[16384]{0}', space=vmem, size = 0x4000, scoped, tag = 'input window, operand 0']
    #allocation3 [shape = 's32[2]{0}', space=sflag, size = 0x8, scoped, tag = 'scoped memory for tpu_custom_call.1']
    #allocation4 [shape = 's32[2]{0}', space=sflag, size = 0x8, scoped, tag = 'scoped memory for tpu_custom_call.1']
    #allocation5 [shape = 'u8[12288]{0}', space=vmem, size = 0x3000, scoped, tag = 'input window, operand 1, single buffered']
    #allocation6 [shape = 's32[1]{0}', space=sflag, size = 0x4, scoped, tag = 'scoped memory for tpu_custom_call.1']
    #allocation7 [shape = 'u8[32768]{0}', space=vmem, size = 0x8000, scoped, tag = 'output window, operand 0']
    %8 = vsyncpa [#allocation3], 0
    %s9 = scalar_lea.sflag [#allocation3], 1
    %10 = vsyncpa %s9, 0
    %11 = vsyncpa [#allocation6], 0
    %12 = vsyncpa [#allocation4], 0
    %s13 = scalar_lea.sflag [#allocation4], 1
    %14 = vsyncpa %s13, 0
    loop: start=0, step=1, limit=4
    $region2: #{tpu_custom_call.1} parent=1 // loop_pre_header
      _
    $region3: #{tpu_custom_call.1} parent=1 // loop_header
      %s16 = sphi 0, %s20
      %p17 = scmp.ge.s32.totalorder %s16, 4
      %s26 = sphi 0, %s28
      %s29 = sphi 0, %s26
      %s30 = sphi 0, %s29
      %s46 = sphi 0, %s30
      %s50 = sphi 0, %s50
      %s52 = sphi 0, %s50
      %s53 = sphi 0, %s52
      %s67 = sphi 0, %s53
      %s71 = sphi 0, %s71
      %s73 = sphi 0, %s71
      %s74 = sphi 0, %s73
      %s88 = sphi 0, %s74
      %s94 = sphi 0, %s96
      %s97 = sphi 0, %s94
      %s98 = sphi 0, %s97
      %s114 = sphi 0, %s98
    $region4: #{tpu_custom_call.1} parent=1 // loop_header_branch
      %19 = sbr.rel (%p17) target = $region8
    $region5: #{tpu_custom_call.1} parent=1 // loop_body
      %s21 = ssub.s32 %s16, 1
      %s22 = ssub.s32 %s16, 2
      %s23 = sadd.s32 %s16, 1
      %s24 = ssub.s32 %s16, %s23
      %p25 = scmp.eq.s32.totalorder %s24, 0
      %s27 = sadd.s32 %s26, 1
      %s28 = scalar_select %p25, %s26, %s27
      %p31 = pneg %p25
      %p32 = scmp.eq.s32.totalorder %s16, 1
      %p33 = por %p31, %p32
      %p34 = scmp.ne.s32.totalorder %s26, %s29
      %p35 = scmp.eq.s32.totalorder %s16, 0
      %p36 = por %p34, %p35
      %p37 = scmp.ne.s32.totalorder %s26, %s29
      %p38 = scmp.eq.s32.totalorder %s21, 1
      %p39 = por %p37, %p38
      %p40 = scmp.ne.s32.totalorder %s29, %s30
      %p41 = scmp.eq.s32.totalorder %s21, 0
      %p42 = por %p40, %p41
      %p43 = scmp.ne.s32.totalorder %s29, %s30
      %p44 = scmp.eq.s32.totalorder %s22, 1
      %p45 = por %p43, %p44
      %p47 = scmp.ne.s32.totalorder %s30, %s46
      %p48 = scmp.eq.s32.totalorder %s22, 0
      %p49 = por %p47, %p48
      %s51 = sadd.s32 %s50, 1
      %p54 = scmp.eq.s32.totalorder %s16, 1
      %p55 = scmp.ne.s32.totalorder %s50, %s52
      %p56 = scmp.eq.s32.totalorder %s16, 0
      %p57 = por %p55, %p56
      %p58 = scmp.ne.s32.totalorder %s50, %s52
      %p59 = scmp.eq.s32.totalorder %s21, 1
      %p60 = por %p58, %p59
      %p61 = scmp.ne.s32.totalorder %s52, %s53
      %p62 = scmp.eq.s32.totalorder %s21, 0
      %p63 = por %p61, %p62
      %p64 = scmp.ne.s32.totalorder %s52, %s53
      %p65 = scmp.eq.s32.totalorder %s22, 1
      %p66 = por %p64, %p65
      %p68 = scmp.ne.s32.totalorder %s53, %s67
      %p69 = scmp.eq.s32.totalorder %s22, 0
      %p70 = por %p68, %p69
      %s72 = sadd.s32 %s71, 1
      %p75 = scmp.eq.s32.totalorder %s16, 1
      %p76 = scmp.ne.s32.totalorder %s71, %s73
      %p77 = scmp.eq.s32.totalorder %s16, 0
      %p78 = por %p76, %p77
      %p79 = scmp.ne.s32.totalorder %s71, %s73
      %p80 = scmp.eq.s32.totalorder %s21, 1
      %p81 = por %p79, %p80
      %p82 = scmp.ne.s32.totalorder %s73, %s74
      %p83 = scmp.eq.s32.totalorder %s21, 0
      %p84 = por %p82, %p83
      %p85 = scmp.ne.s32.totalorder %s73, %s74
      %p86 = scmp.eq.s32.totalorder %s22, 1
      %p87 = por %p85, %p86
      %p89 = scmp.ne.s32.totalorder %s74, %s88
      %p90 = scmp.eq.s32.totalorder %s22, 0
      %p91 = por %p89, %p90
      %s92 = ssub.s32 %s16, %s23
      %p93 = scmp.eq.s32.totalorder %s92, 0
      %s95 = sadd.s32 %s94, 1
      %s96 = scalar_select %p93, %s94, %s95
      %p99 = pneg %p93
      %p100 = scmp.eq.s32.totalorder %s16, 1
      %p101 = por %p99, %p100
      %p102 = scmp.ne.s32.totalorder %s94, %s97
      %p103 = scmp.eq.s32.totalorder %s16, 0
      %p104 = por %p102, %p103
      %p105 = scmp.ne.s32.totalorder %s94, %s97
      %p106 = scmp.eq.s32.totalorder %s21, 1
      %p107 = por %p105, %p106
      %p108 = scmp.ne.s32.totalorder %s97, %s98
      %p109 = scmp.eq.s32.totalorder %s21, 0
      %p110 = por %p108, %p109
      %p111 = scmp.ne.s32.totalorder %s97, %s98
      %p112 = scmp.eq.s32.totalorder %s22, 1
      %p113 = por %p111, %p112
      %p115 = scmp.ne.s32.totalorder %s98, %s114
      %p116 = scmp.eq.s32.totalorder %s22, 0
      %p117 = por %p115, %p116
      %p118 = scmp.le.s32.totalorder 1, %s16
      %p119 = scmp.lt.s32.totalorder %s16, 3
      %p120 = pnand %p118, %p119
      %p121 = pneg %p120
      // Predicated region
      $region9: #{tpu_custom_call.1} parent=5 // pred_check
        _
      $region10: #{tpu_custom_call.1} parent=5 // pred_check_branch
        %123 = sbr.rel (%p120) target = $region12
      $region11: #{tpu_custom_call.1} parent=5 // pred_region
        %s124 = ssub.s32 %s16, 1
        // Predicated region
        $region13: #{tpu_custom_call.1} parent=11 // pred_check
          %p125 = pneg %p63
        $region14: #{tpu_custom_call.1} parent=11 // pred_check_branch
          %127 = sbr.rel (%p125) target = $region16
        $region15: #{tpu_custom_call.1} parent=11 // pred_region
          %s129 = ssub.s32 384, 384
          %130 = vsyncadd [#allocation6], %s129
          %s131 = sshll.u32 [#allocation5], 4
          %s132 = int_to_ptr.vmem [resolvable:$true] %s131
          %137 = dma.hbm_to_vmem [thread:$0]  %s1, 384, %s132, [#allocation6], 128, 128, 8
        $region16: #{tpu_custom_call.1} parent=11 // pred_fallthru
          _
        // Predicated region
        $region17: #{tpu_custom_call.1} parent=11 // pred_check
          %p138 = pneg %p84
        $region18: #{tpu_custom_call.1} parent=11 // pred_check_branch
          %140 = sbr.rel (%p138) target = $region20
        $region19: #{tpu_custom_call.1} parent=11 // pred_region
          _
        $region20: #{tpu_custom_call.1} parent=11 // pred_fallthru
          _
      $region12: #{tpu_custom_call.1} parent=5 // pred_fallthru
        _
      %p141 = scmp.lt.s32.totalorder %s16, 2
      // Predicated region
      $region21: #{tpu_custom_call.1} parent=5 // pred_check
        %p142 = pneg %p141
      $region22: #{tpu_custom_call.1} parent=5 // pred_check_branch
        %144 = sbr.rel (%p142) target = $region24
      $region23: #{tpu_custom_call.1} parent=5 // pred_region
        // Predicated region
        $region25: #{tpu_custom_call.1} parent=23 // pred_check
          %p145 = pneg %p36
        $region26: #{tpu_custom_call.1} parent=23 // pred_check_branch
          %147 = sbr.rel (%p145) target = $region28
        $region27: #{tpu_custom_call.1} parent=23 // pred_region
          %s148 = sand.u32 %s26, 1
          %s149 = scalar_lea.sflag [#allocation3], %s148
          %s150 = sand.u32 %s26, 1
          %s151 = smul.addr %s150, 16
          %s152 = scalar_lea.vmem [#allocation2], %s151
          %s154 = ssub.s32 256, 256
          %155 = vsyncadd %s149, %s154
          %s156 = smul.addr %s16, 4
          %s157 = smul.addr %s156, 64
          %s158 = scalar_lea.hbm %s0, %s157
          %s160 = sshll.u32 %s152, 4
          %s161 = int_to_ptr.vmem [resolvable:$true] %s160
          %163 = dma.hbm_to_vmem [thread:$0]  %s158, 256, %s161, %s149
        $region28: #{tpu_custom_call.1} parent=23 // pred_fallthru
          _
      $region24: #{tpu_custom_call.1} parent=5 // pred_fallthru
        _
      %p164 = scmp.le.s32.totalorder 1, %s16
      %p165 = scmp.lt.s32.totalorder %s16, 3
      %p166 = pnand %p164, %p165
      %p167 = pneg %p166
      // Predicated region
      $region29: #{tpu_custom_call.1} parent=5 // pred_check
        _
      $region30: #{tpu_custom_call.1} parent=5 // pred_check_branch
        %169 = sbr.rel (%p166) target = $region32
      $region31: #{tpu_custom_call.1} parent=5 // pred_region
        %s170 = ssub.s32 %s16, 1
        %s171 = sand.u32 %s29, 1
        %s172 = scalar_lea.sflag [#allocation3], %s171
        %s173 = sand.u32 %s29, 1
        %s174 = smul.addr %s173, 16
        %s175 = scalar_lea.vmem [#allocation2], %s174
        // Predicated region
        $region33: #{tpu_custom_call.1} parent=31 // pred_check
          %p176 = pneg %p42
        $region34: #{tpu_custom_call.1} parent=31 // pred_check_branch
          %178 = sbr.rel (%p176) target = $region36
        $region35: #{tpu_custom_call.1} parent=31 // pred_region
          %179 = dma.done %s172, 256
        $region36: #{tpu_custom_call.1} parent=31 // pred_fallthru
          _
        // Predicated region
        $region37: #{tpu_custom_call.1} parent=31 // pred_check
          %p180 = pneg %p63
        $region38: #{tpu_custom_call.1} parent=31 // pred_check_branch
          %182 = sbr.rel (%p180) target = $region40
        $region39: #{tpu_custom_call.1} parent=31 // pred_region
          %183 = dma.done [#allocation6], 384
        $region40: #{tpu_custom_call.1} parent=31 // pred_fallthru
          _
        %s184 = sand.u32 %s29, 1
        %s185 = scalar_lea.sflag [#allocation3], %s184
        %s186 = sand.u32 %s29, 1
        %s187 = smul.addr %s186, 16
        %s188 = scalar_lea.vmem [#allocation2], %s187
        %p189 = pneg %p42
        %p190 = pneg %p39
        %p191 = pneg %p63
        %p192 = pneg %p60
        %p193 = pneg %p84
        %p194 = pneg %p81
        %p195 = pneg %p110
        %p196 = pneg %p107
        %s197 = sand.u32 %s97, 1
        %s198 = scalar_lea.sflag [#allocation4], %s197
        %s199 = sand.u32 %s97, 1
        %s200 = smul.addr %s199, 32
        %s201 = scalar_lea.vmem [#allocation7], %s200
        %v202 = vld [vmem:[%s175] sm:$0xff]
        %v203 = vld [vmem:[%s175 + $0x8] sm:$0xff]
        %v206 = vcombine.high %v202, %v202
        %v207 = vcombine.high %v203, %v203
        %vm210 = vcmask 1043456
        %v211 = vsel %vm210, %v202, 0.0
        %v212 = vsel %vm210, %v206, 0.0
        %v213 = vadd.f32 %v211, %v212
        %v214 = vsel %vm210, %v203, 0.0
        %v215 = vadd.f32 %v213, %v214
        %v216 = vsel %vm210, %v207, 0.0
        %v217 = vadd.f32 %v215, %v216
        %218 = vadd.xlane.f32.xlu0 %v217
        %v219 = vpop.xlane.xlu0 %218
        %v220 = vmul.f32 %v219, 0.001953125
        %v223 = vunpack.c.l.s4 839922192
        %v224 = vunpack.c.0.s8 %v223
        %v225 = vlaneseq
        %v226 = vshrl.u32 %v225, 7
        %v227 = vsub.s32 %v224, %v226
        %v228 = vrot.slane %v220, %v227
        %v230 = vsub.f32 %v202, %v228
        %v231 = vsub.f32 %v203, %v228
        %v232 = vmul.f32 %v230, %v230
        %v233 = vmul.f32 %v231, %v231
        %v236 = vcombine.high %v232, %v232
        %v237 = vcombine.high %v233, %v233
        %v240 = vsel %vm210, %v232, 0.0
        %v241 = vsel %vm210, %v236, 0.0
        %v242 = vadd.f32 %v240, %v241
        %v243 = vsel %vm210, %v233, 0.0
        %v244 = vadd.f32 %v242, %v243
        %v245 = vsel %vm210, %v237, 0.0
        %v246 = vadd.f32 %v244, %v245
        %247 = vadd.xlane.f32.xlu0 %v246
        %v248 = vpop.xlane.xlu0 %247
        %v249 = vmul.f32 %v248, 0.001953125
        %v250 = vadd.f32 %v249, 1e-05
        %v251 = vrsqrt.pop %v250
        %v254 = vunpack.c.l.s4 839922192
        %v255 = vunpack.c.0.s8 %v254
        %v256 = vlaneseq
        %v257 = vshrl.u32 %v256, 7
        %v258 = vsub.s32 %v255, %v257
        %v259 = vrot.slane %v251, %v258
        %v261 = vmul.f32 %v230, %v259
        %v262 = vmul.f32 %v231, %v259
        %vm263 = vcmp.ge.f32.partialorder %v261, 0.0
        %vm264 = vcmp.ge.f32.partialorder %v262, 0.0
        %v265 = vmul.f32 %v261, 0.2
        %v266 = vmul.f32 %v262, 0.2
        %v267 = vsel %vm263, %v261, %v265
        %v268 = vsel %vm264, %v262, %v266
        %v271 = vcombine.high %v267, %v267
        %v272 = vcombine.high %v268, %v268
        %v275 = vsel %vm210, %v267, 0.0
        %v276 = vsel %vm210, %v271, 0.0
        %v277 = vsel %vm210, %v268, 0.0
        %v278 = vsel %vm210, %v272, 0.0
        %v279 = vlaneseq
        %v280 = vand.u32 %v279, 127
        %v281 = vadd.s32 %v280, 128
        %v282 = vadd.s32 %v280, 256
        %v283 = vadd.s32 %v280, 384
        %v284 = vcvt.s32.f32 %v280
        %v285 = vcvt.s32.f32 %v281
        %v286 = vcvt.s32.f32 %v282
        %v287 = vcvt.s32.f32 %v283
        %v288 = vadd.f32 %v284, 0.5
        %v289 = vadd.f32 %v285, 0.5
        %v290 = vadd.f32 %v286, 0.5
        %v291 = vadd.f32 %v287, 0.5
        %v292 = vrcp.pop 64.0
        %v293 = vmul.f32 %v288, %v292
        %v294 = vmul.f32 %v289, %v292
        %v295 = vmul.f32 %v290, %v292
        %v296 = vmul.f32 %v291, %v292
        %v297 = vfloor.f32 %v293
        %v298 = vfloor.f32 %v294
        %v299 = vfloor.f32 %v295
        %v300 = vfloor.f32 %v296
        %v301 = vmul.f32 %v297, 64.0
        %v302 = vmul.f32 %v298, 64.0
        %v303 = vmul.f32 %v299, 64.0
        %v304 = vmul.f32 %v300, 64.0
        %v305 = vsub.f32 %v284, %v301
        %v306 = vsub.f32 %v285, %v302
        %v307 = vsub.f32 %v286, %v303
        %v308 = vsub.f32 %v287, %v304
        %v309 = vadd.f32 %v305, 0.5
        %v310 = vadd.f32 %v306, 0.5
        %v311 = vadd.f32 %v307, 0.5
        %v312 = vadd.f32 %v308, 0.5
        %v313 = vrcp.pop 8.0
        %v314 = vmul.f32 %v309, %v313
        %v315 = vmul.f32 %v310, %v313
        %v316 = vmul.f32 %v311, %v313
        %v317 = vmul.f32 %v312, %v313
        %v318 = vfloor.f32 %v314
        %v319 = vfloor.f32 %v315
        %v320 = vfloor.f32 %v316
        %v321 = vfloor.f32 %v317
        %v322 = vmul.f32 %v318, 8.0
        %v323 = vmul.f32 %v319, 8.0
        %v324 = vmul.f32 %v320, 8.0
        %v325 = vmul.f32 %v321, 8.0
        %v326 = vsub.f32 %v305, %v322
        %v327 = vsub.f32 %v306, %v323
        %v328 = vsub.f32 %v307, %v324
        %v329 = vsub.f32 %v308, %v325
        %vm330 = vcmp.ge.f32.partialorder %v297, 1.0
        %vm331 = vcmp.ge.f32.partialorder %v298, 1.0
        %vm332 = vcmp.ge.f32.partialorder %v299, 1.0
        %vm333 = vcmp.ge.f32.partialorder %v300, 1.0
        %v334 = vsel %vm330, 1, 0
        %v335 = vsel %vm331, 1, 0
        %v336 = vsel %vm332, 1, 0
        %v337 = vsel %vm333, 1, 0
        %v338 = vcvt.s32.f32 %v334
        %v339 = vcvt.s32.f32 %v335
        %v340 = vcvt.s32.f32 %v336
        %v341 = vcvt.s32.f32 %v337
        %vm342 = vcmp.le.f32.partialorder %v297, 6.0
        %vm343 = vcmp.le.f32.partialorder %v298, 6.0
        %vm344 = vcmp.le.f32.partialorder %v299, 6.0
        %vm345 = vcmp.le.f32.partialorder %v300, 6.0
        %v346 = vsel %vm342, 1, 0
        %v347 = vsel %vm343, 1, 0
        %v348 = vsel %vm344, 1, 0
        %v349 = vsel %vm345, 1, 0
        %v350 = vcvt.s32.f32 %v346
        %v351 = vcvt.s32.f32 %v347
        %v352 = vcvt.s32.f32 %v348
        %v353 = vcvt.s32.f32 %v349
        %vm354 = vcmp.ge.f32.partialorder %v318, 1.0
        %vm355 = vcmp.ge.f32.partialorder %v319, 1.0
        %vm356 = vcmp.ge.f32.partialorder %v320, 1.0
        %vm357 = vcmp.ge.f32.partialorder %v321, 1.0
        %v358 = vsel %vm354, 1, 0
        %v359 = vsel %vm355, 1, 0
        %v360 = vsel %vm356, 1, 0
        %v361 = vsel %vm357, 1, 0
        %v362 = vcvt.s32.f32 %v358
        %v363 = vcvt.s32.f32 %v359
        %v364 = vcvt.s32.f32 %v360
        %v365 = vcvt.s32.f32 %v361
        %vm366 = vcmp.le.f32.partialorder %v318, 6.0
        %vm367 = vcmp.le.f32.partialorder %v319, 6.0
        %vm368 = vcmp.le.f32.partialorder %v320, 6.0
        %vm369 = vcmp.le.f32.partialorder %v321, 6.0
        %v370 = vsel %vm366, 1, 0
        %v371 = vsel %vm367, 1, 0
        %v372 = vsel %vm368, 1, 0
        %v373 = vsel %vm369, 1, 0
        %v374 = vcvt.s32.f32 %v370
        %v375 = vcvt.s32.f32 %v371
        %v376 = vcvt.s32.f32 %v372
        %v377 = vcvt.s32.f32 %v373
        %vm378 = vcmp.ge.f32.partialorder %v326, 1.0
        %vm379 = vcmp.ge.f32.partialorder %v327, 1.0
        %vm380 = vcmp.ge.f32.partialorder %v328, 1.0
        %vm381 = vcmp.ge.f32.partialorder %v329, 1.0
        %v382 = vsel %vm378, 1, 0
        %v383 = vsel %vm379, 1, 0
        %v384 = vsel %vm380, 1, 0
        %v385 = vsel %vm381, 1, 0
        %v386 = vcvt.s32.f32 %v382
        %v387 = vcvt.s32.f32 %v383
        %v388 = vcvt.s32.f32 %v384
        %v389 = vcvt.s32.f32 %v385
        %vm390 = vcmp.le.f32.partialorder %v326, 6.0
        %vm391 = vcmp.le.f32.partialorder %v327, 6.0
        %vm392 = vcmp.le.f32.partialorder %v328, 6.0
        %vm393 = vcmp.le.f32.partialorder %v329, 6.0
        %v394 = vsel %vm390, 1, 0
        %v395 = vsel %vm391, 1, 0
        %v396 = vsel %vm392, 1, 0
        %v397 = vsel %vm393, 1, 0
        %v398 = vcvt.s32.f32 %v394
        %v399 = vcvt.s32.f32 %v395
        %v400 = vcvt.s32.f32 %v396
        %v401 = vcvt.s32.f32 %v397
        %v402 = vmul.f32 %v338, %v362
        %v403 = vmul.f32 %v339, %v363
        %v404 = vmul.f32 %v340, %v364
        %v405 = vmul.f32 %v341, %v365
        %v406 = vmul.f32 %v402, %v386
        %v407 = vmul.f32 %v403, %v387
        %v408 = vmul.f32 %v404, %v388
        %v409 = vmul.f32 %v405, %v389
        %410 = vrot.lane.b32.xlu0 %v275, 73
        %v411 = vpop.permute.xlu0 %410
        %412 = vrot.lane.b32.xlu0 %v276, 73
        %v413 = vpop.permute.xlu0 %412
        %414 = vrot.lane.b32.xlu0 %v277, 73
        %v415 = vpop.permute.xlu0 %414
        %416 = vrot.lane.b32.xlu0 %v278, 73
        %v417 = vpop.permute.xlu0 %416
        %vm418 = vcmp.lt.s32.totalorder %v280, 73
        %v419 = vsel %vm418, %v415, %v417
        %v420 = vsel %vm418, %v413, %v415
        %v421 = vsel %vm418, %v411, %v413
        %v422 = vsel %vm418, %v417, %v411
        %v423 = vmul.f32 %v422, %v406
        %v424 = vmul.f32 %v421, %v407
        %v425 = vmul.f32 %v420, %v408
        %v426 = vmul.f32 %v419, %v409
        %427 = vrot.lane.b32.xlu0 %v275, 72
        %v428 = vpop.permute.xlu0 %427
        %429 = vrot.lane.b32.xlu0 %v276, 72
        %v430 = vpop.permute.xlu0 %429
        %431 = vrot.lane.b32.xlu0 %v277, 72
        %v432 = vpop.permute.xlu0 %431
        %433 = vrot.lane.b32.xlu0 %v278, 72
        %v434 = vpop.permute.xlu0 %433
        %vm435 = vcmp.lt.s32.totalorder %v280, 72
        %v436 = vsel %vm435, %v432, %v434
        %v437 = vsel %vm435, %v430, %v432
        %v438 = vsel %vm435, %v428, %v430
        %v439 = vsel %vm435, %v434, %v428
        %v440 = vmul.f32 %v439, %v402
        %v441 = vmul.f32 %v438, %v403
        %v442 = vmul.f32 %v437, %v404
        %v443 = vmul.f32 %v436, %v405
        %v444 = vmul.f32 %v402, %v398
        %v445 = vmul.f32 %v403, %v399
        %v446 = vmul.f32 %v404, %v400
        %v447 = vmul.f32 %v405, %v401
        %448 = vrot.lane.b32.xlu0 %v275, 71
        %v449 = vpop.permute.xlu0 %448
        %450 = vrot.lane.b32.xlu0 %v276, 71
        %v451 = vpop.permute.xlu0 %450
        %452 = vrot.lane.b32.xlu0 %v277, 71
        %v453 = vpop.permute.xlu0 %452
        %454 = vrot.lane.b32.xlu0 %v278, 71
        %v455 = vpop.permute.xlu0 %454
        %vm456 = vcmp.lt.s32.totalorder %v280, 71
        %v457 = vsel %vm456, %v453, %v455
        %v458 = vsel %vm456, %v451, %v453
        %v459 = vsel %vm456, %v449, %v451
        %v460 = vsel %vm456, %v455, %v449
        %v461 = vmul.f32 %v460, %v444
        %v462 = vmul.f32 %v459, %v445
        %v463 = vmul.f32 %v458, %v446
        %v464 = vmul.f32 %v457, %v447
        %v465 = vmul.f32 %v338, %v386
        %v466 = vmul.f32 %v339, %v387
        %v467 = vmul.f32 %v340, %v388
        %v468 = vmul.f32 %v341, %v389
        %469 = vrot.lane.b32.xlu0 %v275, 65
        %v470 = vpop.permute.xlu0 %469
        %471 = vrot.lane.b32.xlu0 %v276, 65
        %v472 = vpop.permute.xlu0 %471
        %473 = vrot.lane.b32.xlu0 %v277, 65
        %v474 = vpop.permute.xlu0 %473
        %475 = vrot.lane.b32.xlu0 %v278, 65
        %v476 = vpop.permute.xlu0 %475
        %vm477 = vcmp.lt.s32.totalorder %v280, 65
        %v478 = vsel %vm477, %v474, %v476
        %v479 = vsel %vm477, %v472, %v474
        %v480 = vsel %vm477, %v470, %v472
        %v481 = vsel %vm477, %v476, %v470
        %v482 = vmul.f32 %v481, %v465
        %v483 = vmul.f32 %v480, %v466
        %v484 = vmul.f32 %v479, %v467
        %v485 = vmul.f32 %v478, %v468
        %486 = vrot.lane.b32.xlu0 %v275, 64
        %v487 = vpop.permute.xlu0 %486
        %488 = vrot.lane.b32.xlu0 %v276, 64
        %v489 = vpop.permute.xlu0 %488
        %490 = vrot.lane.b32.xlu0 %v277, 64
        %v491 = vpop.permute.xlu0 %490
        %492 = vrot.lane.b32.xlu0 %v278, 64
        %v493 = vpop.permute.xlu0 %492
        %vm494 = vcmp.lt.s32.totalorder %v280, 64
        %v495 = vsel %vm494, %v491, %v493
        %v496 = vsel %vm494, %v489, %v491
        %v497 = vsel %vm494, %v487, %v489
        %v498 = vsel %vm494, %v493, %v487
        %v499 = vmul.f32 %v498, %v338
        %v500 = vmul.f32 %v497, %v339
        %v501 = vmul.f32 %v496, %v340
        %v502 = vmul.f32 %v495, %v341
        %v503 = vmul.f32 %v338, %v398
        %v504 = vmul.f32 %v339, %v399
        %v505 = vmul.f32 %v340, %v400
        %v506 = vmul.f32 %v341, %v401
        %507 = vrot.lane.b32.xlu0 %v275, 63
        %v508 = vpop.permute.xlu0 %507
        %509 = vrot.lane.b32.xlu0 %v276, 63
        %v510 = vpop.permute.xlu0 %509
        %511 = vrot.lane.b32.xlu0 %v277, 63
        %v512 = vpop.permute.xlu0 %511
        %513 = vrot.lane.b32.xlu0 %v278, 63
        %v514 = vpop.permute.xlu0 %513
        %vm515 = vcmp.lt.s32.totalorder %v280, 63
        %v516 = vsel %vm515, %v512, %v514
        %v517 = vsel %vm515, %v510, %v512
        %v518 = vsel %vm515, %v508, %v510
        %v519 = vsel %vm515, %v514, %v508
        %v520 = vmul.f32 %v519, %v503
        %v521 = vmul.f32 %v518, %v504
        %v522 = vmul.f32 %v517, %v505
        %v523 = vmul.f32 %v516, %v506
        %v524 = vmul.f32 %v338, %v374
        %v525 = vmul.f32 %v339, %v375
        %v526 = vmul.f32 %v340, %v376
        %v527 = vmul.f32 %v341, %v377
        %v528 = vmul.f32 %v524, %v386
        %v529 = vmul.f32 %v525, %v387
        %v530 = vmul.f32 %v526, %v388
        %v531 = vmul.f32 %v527, %v389
        %532 = vrot.lane.b32.xlu0 %v275, 57
        %v533 = vpop.permute.xlu0 %532
        %534 = vrot.lane.b32.xlu0 %v276, 57
        %v535 = vpop.permute.xlu0 %534
        %536 = vrot.lane.b32.xlu0 %v277, 57
        %v537 = vpop.permute.xlu0 %536
        %538 = vrot.lane.b32.xlu0 %v278, 57
        %v539 = vpop.permute.xlu0 %538
        %vm540 = vcmp.lt.s32.totalorder %v280, 57
        %v541 = vsel %vm540, %v537, %v539
        %v542 = vsel %vm540, %v535, %v537
        %v543 = vsel %vm540, %v533, %v535
        %v544 = vsel %vm540, %v539, %v533
        %v545 = vmul.f32 %v544, %v528
        %v546 = vmul.f32 %v543, %v529
        %v547 = vmul.f32 %v542, %v530
        %v548 = vmul.f32 %v541, %v531
        %549 = vrot.lane.b32.xlu0 %v275, 56
        %v550 = vpop.permute.xlu0 %549
        %551 = vrot.lane.b32.xlu0 %v276, 56
        %v552 = vpop.permute.xlu0 %551
        %553 = vrot.lane.b32.xlu0 %v277, 56
        %v554 = vpop.permute.xlu0 %553
        %555 = vrot.lane.b32.xlu0 %v278, 56
        %v556 = vpop.permute.xlu0 %555
        %vm557 = vcmp.lt.s32.totalorder %v280, 56
        %v558 = vsel %vm557, %v554, %v556
        %v559 = vsel %vm557, %v552, %v554
        %v560 = vsel %vm557, %v550, %v552
        %v561 = vsel %vm557, %v556, %v550
        %v562 = vmul.f32 %v561, %v524
        %v563 = vmul.f32 %v560, %v525
        %v564 = vmul.f32 %v559, %v526
        %v565 = vmul.f32 %v558, %v527
        %v566 = vmul.f32 %v524, %v398
        %v567 = vmul.f32 %v525, %v399
        %v568 = vmul.f32 %v526, %v400
        %v569 = vmul.f32 %v527, %v401
        %570 = vrot.lane.b32.xlu0 %v275, 55
        %v571 = vpop.permute.xlu0 %570
        %572 = vrot.lane.b32.xlu0 %v276, 55
        %v573 = vpop.permute.xlu0 %572
        %574 = vrot.lane.b32.xlu0 %v277, 55
        %v575 = vpop.permute.xlu0 %574
        %576 = vrot.lane.b32.xlu0 %v278, 55
        %v577 = vpop.permute.xlu0 %576
        %vm578 = vcmp.lt.s32.totalorder %v280, 55
        %v579 = vsel %vm578, %v575, %v577
        %v580 = vsel %vm578, %v573, %v575
        %v581 = vsel %vm578, %v571, %v573
        %v582 = vsel %vm578, %v577, %v571
        %v583 = vmul.f32 %v582, %v566
        %v584 = vmul.f32 %v581, %v567
        %v585 = vmul.f32 %v580, %v568
        %v586 = vmul.f32 %v579, %v569
        %v587 = vld [vmem:[#allocation5] sm:$0xff]
        %v588 = vmul.f32 %v362, %v386
        %v589 = vmul.f32 %v363, %v387
        %v590 = vmul.f32 %v364, %v388
        %v591 = vmul.f32 %v365, %v389
        %592 = vrot.lane.b32.xlu0 %v275, 9
        %v593 = vpop.permute.xlu0 %592
        %594 = vrot.lane.b32.xlu0 %v276, 9
        %v595 = vpop.permute.xlu0 %594
        %596 = vrot.lane.b32.xlu0 %v277, 9
        %v597 = vpop.permute.xlu0 %596
        %598 = vrot.lane.b32.xlu0 %v278, 9
        %v599 = vpop.permute.xlu0 %598
        %vm600 = vcmp.lt.s32.totalorder %v280, 9
        %v601 = vsel %vm600, %v597, %v599
        %v602 = vsel %vm600, %v595, %v597
        %v603 = vsel %vm600, %v593, %v595
        %v604 = vsel %vm600, %v599, %v593
        %v605 = vmul.f32 %v604, %v588
        %v606 = vmul.f32 %v603, %v589
        %v607 = vmul.f32 %v602, %v590
        %v608 = vmul.f32 %v601, %v591
        %609 = vrot.lane.b32.xlu0 %v275, 8
        %v610 = vpop.permute.xlu0 %609
        %611 = vrot.lane.b32.xlu0 %v276, 8
        %v612 = vpop.permute.xlu0 %611
        %613 = vrot.lane.b32.xlu0 %v277, 8
        %v614 = vpop.permute.xlu0 %613
        %615 = vrot.lane.b32.xlu0 %v278, 8
        %v616 = vpop.permute.xlu0 %615
        %vm617 = vcmp.lt.s32.totalorder %v280, 8
        %v618 = vsel %vm617, %v614, %v616
        %v619 = vsel %vm617, %v612, %v614
        %v620 = vsel %vm617, %v610, %v612
        %v621 = vsel %vm617, %v616, %v610
        %v622 = vmul.f32 %v621, %v362
        %v623 = vmul.f32 %v620, %v363
        %v624 = vmul.f32 %v619, %v364
        %v625 = vmul.f32 %v618, %v365
        %v626 = vmul.f32 %v362, %v398
        %v627 = vmul.f32 %v363, %v399
        %v628 = vmul.f32 %v364, %v400
        %v629 = vmul.f32 %v365, %v401
        %630 = vrot.lane.b32.xlu0 %v275, 7
        %v631 = vpop.permute.xlu0 %630
        %632 = vrot.lane.b32.xlu0 %v276, 7
        %v633 = vpop.permute.xlu0 %632
        %634 = vrot.lane.b32.xlu0 %v277, 7
        %v635 = vpop.permute.xlu0 %634
        %636 = vrot.lane.b32.xlu0 %v278, 7
        %v637 = vpop.permute.xlu0 %636
        %vm638 = vcmp.lt.s32.totalorder %v280, 7
        %v639 = vsel %vm638, %v635, %v637
        %v640 = vsel %vm638, %v633, %v635
        %v641 = vsel %vm638, %v631, %v633
        %v642 = vsel %vm638, %v637, %v631
        %v643 = vmul.f32 %v642, %v626
        %v644 = vmul.f32 %v641, %v627
        %v645 = vmul.f32 %v640, %v628
        %v646 = vmul.f32 %v639, %v629
        %647 = vrot.lane.b32.xlu0 %v275, 1
        %v648 = vpop.permute.xlu0 %647
        %649 = vrot.lane.b32.xlu0 %v276, 1
        %v650 = vpop.permute.xlu0 %649
        %651 = vrot.lane.b32.xlu0 %v277, 1
        %v652 = vpop.permute.xlu0 %651
        %653 = vrot.lane.b32.xlu0 %v278, 1
        %v654 = vpop.permute.xlu0 %653
        %vm655 = vcmp.lt.s32.totalorder %v280, 1
        %v656 = vsel %vm655, %v652, %v654
        %v657 = vsel %vm655, %v650, %v652
        %v658 = vsel %vm655, %v648, %v650
        %v659 = vsel %vm655, %v654, %v648
        %v660 = vmul.f32 %v659, %v386
        %v661 = vmul.f32 %v658, %v387
        %v662 = vmul.f32 %v657, %v388
        %v663 = vmul.f32 %v656, %v389
        %664 = vrot.lane.b32.xlu0 %v275, 127
        %v665 = vpop.permute.xlu0 %664
        %666 = vrot.lane.b32.xlu0 %v276, 127
        %v667 = vpop.permute.xlu0 %666
        %668 = vrot.lane.b32.xlu0 %v277, 127
        %v669 = vpop.permute.xlu0 %668
        %670 = vrot.lane.b32.xlu0 %v278, 127
        %v671 = vpop.permute.xlu0 %670
        %vm672 = vcmp.lt.s32.totalorder %v280, 127
        %v673 = vsel %vm672, %v669, %v671
        %v674 = vsel %vm672, %v667, %v669
        %v675 = vsel %vm672, %v665, %v667
        %v676 = vsel %vm672, %v671, %v665
        %v677 = vmul.f32 %v675, %v398
        %v678 = vmul.f32 %v674, %v399
        %v679 = vmul.f32 %v673, %v400
        %v680 = vmul.f32 %v676, %v401
        %v681 = vmul.f32 %v374, %v386
        %v682 = vmul.f32 %v375, %v387
        %v683 = vmul.f32 %v376, %v388
        %v684 = vmul.f32 %v377, %v389
        %685 = vrot.lane.b32.xlu0 %v275, 121
        %v686 = vpop.permute.xlu0 %685
        %687 = vrot.lane.b32.xlu0 %v276, 121
        %v688 = vpop.permute.xlu0 %687
        %689 = vrot.lane.b32.xlu0 %v277, 121
        %v690 = vpop.permute.xlu0 %689
        %691 = vrot.lane.b32.xlu0 %v278, 121
        %v692 = vpop.permute.xlu0 %691
        %vm693 = vcmp.lt.s32.totalorder %v280, 121
        %v694 = vsel %vm693, %v690, %v692
        %v695 = vsel %vm693, %v688, %v690
        %v696 = vsel %vm693, %v686, %v688
        %v697 = vsel %vm693, %v692, %v686
        %v698 = vmul.f32 %v696, %v681
        %v699 = vmul.f32 %v695, %v682
        %v700 = vmul.f32 %v694, %v683
        %v701 = vmul.f32 %v697, %v684
        %702 = vrot.lane.b32.xlu0 %v275, 120
        %v703 = vpop.permute.xlu0 %702
        %704 = vrot.lane.b32.xlu0 %v276, 120
        %v705 = vpop.permute.xlu0 %704
        %706 = vrot.lane.b32.xlu0 %v277, 120
        %v707 = vpop.permute.xlu0 %706
        %708 = vrot.lane.b32.xlu0 %v278, 120
        %v709 = vpop.permute.xlu0 %708
        %vm710 = vcmp.lt.s32.totalorder %v280, 120
        %v711 = vsel %vm710, %v707, %v709
        %v712 = vsel %vm710, %v705, %v707
        %v713 = vsel %vm710, %v703, %v705
        %v714 = vsel %vm710, %v709, %v703
        %v715 = vmul.f32 %v713, %v374
        %v716 = vmul.f32 %v712, %v375
        %v717 = vmul.f32 %v711, %v376
        %v718 = vmul.f32 %v714, %v377
        %v719 = vmul.f32 %v374, %v398
        %v720 = vmul.f32 %v375, %v399
        %v721 = vmul.f32 %v376, %v400
        %v722 = vmul.f32 %v377, %v401
        %723 = vrot.lane.b32.xlu0 %v275, 119
        %v724 = vpop.permute.xlu0 %723
        %725 = vrot.lane.b32.xlu0 %v276, 119
        %v726 = vpop.permute.xlu0 %725
        %727 = vrot.lane.b32.xlu0 %v277, 119
        %v728 = vpop.permute.xlu0 %727
        %729 = vrot.lane.b32.xlu0 %v278, 119
        %v730 = vpop.permute.xlu0 %729
        %vm731 = vcmp.lt.s32.totalorder %v280, 119
        %v732 = vsel %vm731, %v728, %v730
        %v733 = vsel %vm731, %v726, %v728
        %v734 = vsel %vm731, %v724, %v726
        %v735 = vsel %vm731, %v730, %v724
        %v736 = vmul.f32 %v734, %v719
        %v737 = vmul.f32 %v733, %v720
        %v738 = vmul.f32 %v732, %v721
        %v739 = vmul.f32 %v735, %v722
        %s740 = scalar_lea.vmem [#allocation5], 8
        %v741 = vld [vmem:[%s740] sm:$0xff]
        %vm742 = vcmask 588800
        %v744 = vsel %vm742, %v741, 0
        %746 = vmatprep.subr.mxu0 %v606
        %747 = vmatpush1.msra.mxu0 %v605
        %748 = vmatprep.subr.mxu0 %v623
        %749 = vmatpush1.msra.mxu0 %v622
        %750 = vmatprep.subr.mxu0 %v644
        %751 = vmatpush1.msra.mxu0 %v643
        %752 = vmatprep.subr.mxu0 %v661
        %753 = vmatpush1.msra.mxu0 %v660
        %754 = vmatprep.subr.mxu0 %v276
        %755 = vmatpush1.msra.mxu0 %v275
        %756 = vmatprep.subr.mxu0 %v678
        %757 = vmatpush1.msra.mxu0 %v677
        %758 = vmatprep.subr.mxu0 %v699
        %759 = vmatpush1.msra.mxu0 %v698
        %760 = vmatprep.subr.mxu0 %v716
        %761 = vmatpush1.msra.mxu0 %v715
        %762 = vmatprep.subr.mxu0 %v737
        %763 = vmatpush1.msra.mxu0 %v736
        %764 = vmatprep.subr.mxu0 0.0
        %765 = vmatpush1.msra.mxu0 0.0
        %766 = vmatprep.subr.mxu0 0.0
        %767 = vmatpush1.msra.mxu0 0.0
        %768 = vmatprep.subr.mxu0 0.0
        %769 = vmatpush1.msra.mxu0 0.0
        %770 = vmatprep.subr.mxu0 0.0
        %771 = vmatpush1.msra.mxu0 0.0
        %772 = vmatprep.subr.mxu0 0.0
        %773 = vmatpush1.msra.mxu0 0.0
        %774 = vmatprep.subr.mxu0 0.0
        %775 = vmatpush1.msra.mxu0 0.0
        %776 = vmatprep.subr.mxu0 0.0
        %777 = vmatpush1.msra.mxu0 0.0
        %778 = vmatprep.subr.mxu0 0.0
        %779 = vmatpush1.msra.mxu0 0.0
        %780 = vmatprep.subr.mxu0 0.0
        %781 = vmatpush1.msra.mxu0 0.0
        %782 = vmatprep.subr.mxu0 0.0
        %783 = vmatpush1.msra.mxu0 0.0
        %784 = vmatprep.subr.mxu0 0.0
        %785 = vmatpush1.msra.mxu0 0.0
        %786 = vmatprep.subr.mxu0 0.0
        %787 = vmatpush1.msra.mxu0 0.0
        %788 = vmatprep.subr.mxu0 0.0
        %789 = vmatpush1.msra.mxu0 0.0
        %790 = vmatprep.subr.mxu0 0.0
        %791 = vmatpush1.msra.mxu0 0.0
        %792 = vmatprep.subr.mxu0 0.0
        %793 = vmatpush1.msra.mxu0 0.0
        %794 = vmatprep.subr.mxu0 0.0
        %795 = vmatpush1.msra.mxu0 0.0
        %796 = vmatprep.subr.mxu0 0.0
        %797 = vmatpush1.msra.mxu0 0.0
        %798 = vmatprep.subr.mxu0 0.0
        %799 = vmatpush1.msra.mxu0 0.0
        %800 = vmatprep.subr.mxu0 0.0
        %801 = vmatpush1.msra.mxu0 0.0
        %802 = vmatprep.subr.mxu0 0.0
        %803 = vmatpush1.msra.mxu0 0.0
        %804 = vmatprep.subr.mxu0 0.0
        %805 = vmatpush1.msra.mxu0 0.0
        %806 = vmatprep.subr.mxu0 0.0
        %807 = vmatpush1.msra.mxu0 0.0
        %808 = vmatprep.subr.mxu0 0.0
        %809 = vmatpush1.msra.mxu0 0.0
        %810 = vmatprep.mubr.f32.mxu0 0.0
        %811 = vmatmul.mubr.f32.gmra.mrb[0].mxu0 %v744
        %v812 = vpop.f32.mrb[0].mxu0
        %v813 = vadd.f32 0.0, %v812
        %v814 = vpop.f32.mrb[0].mxu0
        %v815 = vadd.f32 0.0, %v814
        %816 = vdwg.mxu0
        %817 = vmatprep.subr.mxu0 %v608
        %818 = vmatpush1.msra.mxu0 %v607
        %819 = vmatprep.subr.mxu0 %v625
        %820 = vmatpush1.msra.mxu0 %v624
        %821 = vmatprep.subr.mxu0 %v646
        %822 = vmatpush1.msra.mxu0 %v645
        %823 = vmatprep.subr.mxu0 %v663
        %824 = vmatpush1.msra.mxu0 %v662
        %825 = vmatprep.subr.mxu0 %v278
        %826 = vmatpush1.msra.mxu0 %v277
        %827 = vmatprep.subr.mxu0 %v680
        %828 = vmatpush1.msra.mxu0 %v679
        %829 = vmatprep.subr.mxu0 %v701
        %830 = vmatpush1.msra.mxu0 %v700
        %831 = vmatprep.subr.mxu0 %v718
        %832 = vmatpush1.msra.mxu0 %v717
        %833 = vmatprep.subr.mxu0 %v739
        %834 = vmatpush1.msra.mxu0 %v738
        %835 = vmatprep.subr.mxu0 0.0
        %836 = vmatpush1.msra.mxu0 0.0
        %837 = vmatprep.subr.mxu0 0.0
        %838 = vmatpush1.msra.mxu0 0.0
        %839 = vmatprep.subr.mxu0 0.0
        %840 = vmatpush1.msra.mxu0 0.0
        %841 = vmatprep.subr.mxu0 0.0
        %842 = vmatpush1.msra.mxu0 0.0
        %843 = vmatprep.subr.mxu0 0.0
        %844 = vmatpush1.msra.mxu0 0.0
        %845 = vmatprep.subr.mxu0 0.0
        %846 = vmatpush1.msra.mxu0 0.0
        %847 = vmatprep.subr.mxu0 0.0
        %848 = vmatpush1.msra.mxu0 0.0
        %849 = vmatprep.subr.mxu0 0.0
        %850 = vmatpush1.msra.mxu0 0.0
        %851 = vmatprep.subr.mxu0 0.0
        %852 = vmatpush1.msra.mxu0 0.0
        %853 = vmatprep.subr.mxu0 0.0
        %854 = vmatpush1.msra.mxu0 0.0
        %855 = vmatprep.subr.mxu0 0.0
        %856 = vmatpush1.msra.mxu0 0.0
        %857 = vmatprep.subr.mxu0 0.0
        %858 = vmatpush1.msra.mxu0 0.0
        %859 = vmatprep.subr.mxu0 0.0
        %860 = vmatpush1.msra.mxu0 0.0
        %861 = vmatprep.subr.mxu0 0.0
        %862 = vmatpush1.msra.mxu0 0.0
        %863 = vmatprep.subr.mxu0 0.0
        %864 = vmatpush1.msra.mxu0 0.0
        %865 = vmatprep.subr.mxu0 0.0
        %866 = vmatpush1.msra.mxu0 0.0
        %867 = vmatprep.subr.mxu0 0.0
        %868 = vmatpush1.msra.mxu0 0.0
        %869 = vmatprep.subr.mxu0 0.0
        %870 = vmatpush1.msra.mxu0 0.0
        %871 = vmatprep.subr.mxu0 0.0
        %872 = vmatpush1.msra.mxu0 0.0
        %873 = vmatprep.subr.mxu0 0.0
        %874 = vmatpush1.msra.mxu0 0.0
        %875 = vmatprep.subr.mxu0 0.0
        %876 = vmatpush1.msra.mxu0 0.0
        %877 = vmatprep.subr.mxu0 0.0
        %878 = vmatpush1.msra.mxu0 0.0
        %879 = vmatprep.subr.mxu0 0.0
        %880 = vmatpush1.msra.mxu0 0.0
        %881 = vmatprep.mubr.f32.mxu0 0.0
        %882 = vmatmul.mubr.f32.gmra.mrb[0].mxu0 %v744
        %v883 = vpop.f32.mrb[0].mxu0
        %v884 = vadd.f32 0.0, %v883
        %v885 = vpop.f32.mrb[0].mxu0
        %v886 = vadd.f32 0.0, %v885
        %887 = vdwg.mxu0
        %v889 = vsel %vm742, %v587, 0
        %891 = vmatprep.subr.mxu0 %v424
        %892 = vmatpush1.msra.mxu0 %v423
        %893 = vmatprep.subr.mxu0 %v441
        %894 = vmatpush1.msra.mxu0 %v440
        %895 = vmatprep.subr.mxu0 %v462
        %896 = vmatpush1.msra.mxu0 %v461
        %897 = vmatprep.subr.mxu0 %v483
        %898 = vmatpush1.msra.mxu0 %v482
        %899 = vmatprep.subr.mxu0 %v500
        %900 = vmatpush1.msra.mxu0 %v499
        %901 = vmatprep.subr.mxu0 %v521
        %902 = vmatpush1.msra.mxu0 %v520
        %903 = vmatprep.subr.mxu0 %v546
        %904 = vmatpush1.msra.mxu0 %v545
        %905 = vmatprep.subr.mxu0 %v563
        %906 = vmatpush1.msra.mxu0 %v562
        %907 = vmatprep.subr.mxu0 %v584
        %908 = vmatpush1.msra.mxu0 %v583
        %909 = vmatprep.subr.mxu0 0.0
        %910 = vmatpush1.msra.mxu0 0.0
        %911 = vmatprep.subr.mxu0 0.0
        %912 = vmatpush1.msra.mxu0 0.0
        %913 = vmatprep.subr.mxu0 0.0
        %914 = vmatpush1.msra.mxu0 0.0
        %915 = vmatprep.subr.mxu0 0.0
        %916 = vmatpush1.msra.mxu0 0.0
        %917 = vmatprep.subr.mxu0 0.0
        %918 = vmatpush1.msra.mxu0 0.0
        %919 = vmatprep.subr.mxu0 0.0
        %920 = vmatpush1.msra.mxu0 0.0
        %921 = vmatprep.subr.mxu0 0.0
        %922 = vmatpush1.msra.mxu0 0.0
        %923 = vmatprep.subr.mxu0 0.0
        %924 = vmatpush1.msra.mxu0 0.0
        %925 = vmatprep.subr.mxu0 0.0
        %926 = vmatpush1.msra.mxu0 0.0
        %927 = vmatprep.subr.mxu0 0.0
        %928 = vmatpush1.msra.mxu0 0.0
        %929 = vmatprep.subr.mxu0 0.0
        %930 = vmatpush1.msra.mxu0 0.0
        %931 = vmatprep.subr.mxu0 0.0
        %932 = vmatpush1.msra.mxu0 0.0
        %933 = vmatprep.subr.mxu0 0.0
        %934 = vmatpush1.msra.mxu0 0.0
        %935 = vmatprep.subr.mxu0 0.0
        %936 = vmatpush1.msra.mxu0 0.0
        %937 = vmatprep.subr.mxu0 0.0
        %938 = vmatpush1.msra.mxu0 0.0
        %939 = vmatprep.subr.mxu0 0.0
        %940 = vmatpush1.msra.mxu0 0.0
        %941 = vmatprep.subr.mxu0 0.0
        %942 = vmatpush1.msra.mxu0 0.0
        %943 = vmatprep.subr.mxu0 0.0
        %944 = vmatpush1.msra.mxu0 0.0
        %945 = vmatprep.subr.mxu0 0.0
        %946 = vmatpush1.msra.mxu0 0.0
        %947 = vmatprep.subr.mxu0 0.0
        %948 = vmatpush1.msra.mxu0 0.0
        %949 = vmatprep.subr.mxu0 0.0
        %950 = vmatpush1.msra.mxu0 0.0
        %951 = vmatprep.subr.mxu0 0.0
        %952 = vmatpush1.msra.mxu0 0.0
        %953 = vmatprep.subr.mxu0 0.0
        %954 = vmatpush1.msra.mxu0 0.0
        %955 = vmatprep.mubr.f32.mxu0 0.0
        %956 = vmatmul.mubr.f32.gmra.mrb[0].mxu0 %v889
        %v957 = vpop.f32.mrb[0].mxu0
        %v958 = vadd.f32 %v813, %v957
        %v959 = vpop.f32.mrb[0].mxu0
        %v960 = vadd.f32 %v815, %v959
        %961 = vdwg.mxu0
        %962 = vmatprep.subr.mxu0 %v426
        %963 = vmatpush1.msra.mxu0 %v425
        %964 = vmatprep.subr.mxu0 %v443
        %965 = vmatpush1.msra.mxu0 %v442
        %966 = vmatprep.subr.mxu0 %v464
        %967 = vmatpush1.msra.mxu0 %v463
        %968 = vmatprep.subr.mxu0 %v485
        %969 = vmatpush1.msra.mxu0 %v484
        %970 = vmatprep.subr.mxu0 %v502
        %971 = vmatpush1.msra.mxu0 %v501
        %972 = vmatprep.subr.mxu0 %v523
        %973 = vmatpush1.msra.mxu0 %v522
        %974 = vmatprep.subr.mxu0 %v548
        %975 = vmatpush1.msra.mxu0 %v547
        %976 = vmatprep.subr.mxu0 %v565
        %977 = vmatpush1.msra.mxu0 %v564
        %978 = vmatprep.subr.mxu0 %v586
        %979 = vmatpush1.msra.mxu0 %v585
        %980 = vmatprep.subr.mxu0 0.0
        %981 = vmatpush1.msra.mxu0 0.0
        %982 = vmatprep.subr.mxu0 0.0
        %983 = vmatpush1.msra.mxu0 0.0
        %984 = vmatprep.subr.mxu0 0.0
        %985 = vmatpush1.msra.mxu0 0.0
        %986 = vmatprep.subr.mxu0 0.0
        %987 = vmatpush1.msra.mxu0 0.0
        %988 = vmatprep.subr.mxu0 0.0
        %989 = vmatpush1.msra.mxu0 0.0
        %990 = vmatprep.subr.mxu0 0.0
        %991 = vmatpush1.msra.mxu0 0.0
        %992 = vmatprep.subr.mxu0 0.0
        %993 = vmatpush1.msra.mxu0 0.0
        %994 = vmatprep.subr.mxu0 0.0
        %995 = vmatpush1.msra.mxu0 0.0
        %996 = vmatprep.subr.mxu0 0.0
        %997 = vmatpush1.msra.mxu0 0.0
        %998 = vmatprep.subr.mxu0 0.0
        %999 = vmatpush1.msra.mxu0 0.0
        %1000 = vmatprep.subr.mxu0 0.0
        %1001 = vmatpush1.msra.mxu0 0.0
        %1002 = vmatprep.subr.mxu0 0.0
        %1003 = vmatpush1.msra.mxu0 0.0
        %1004 = vmatprep.subr.mxu0 0.0
        %1005 = vmatpush1.msra.mxu0 0.0
        %1006 = vmatprep.subr.mxu0 0.0
        %1007 = vmatpush1.msra.mxu0 0.0
        %1008 = vmatprep.subr.mxu0 0.0
        %1009 = vmatpush1.msra.mxu0 0.0
        %1010 = vmatprep.subr.mxu0 0.0
        %1011 = vmatpush1.msra.mxu0 0.0
        %1012 = vmatprep.subr.mxu0 0.0
        %1013 = vmatpush1.msra.mxu0 0.0
        %1014 = vmatprep.subr.mxu0 0.0
        %1015 = vmatpush1.msra.mxu0 0.0
        %1016 = vmatprep.subr.mxu0 0.0
        %1017 = vmatpush1.msra.mxu0 0.0
        %1018 = vmatprep.subr.mxu0 0.0
        %1019 = vmatpush1.msra.mxu0 0.0
        %1020 = vmatprep.subr.mxu0 0.0
        %1021 = vmatpush1.msra.mxu0 0.0
        %1022 = vmatprep.subr.mxu0 0.0
        %1023 = vmatpush1.msra.mxu0 0.0
        %1024 = vmatprep.subr.mxu0 0.0
        %1025 = vmatpush1.msra.mxu0 0.0
        %1026 = vmatprep.mubr.f32.mxu0 0.0
        %1027 = vmatmul.mubr.f32.gmra.mrb[0].mxu0 %v889
        %v1028 = vpop.f32.mrb[0].mxu0
        %v1029 = vadd.f32 %v884, %v1028
        %v1030 = vpop.f32.mrb[0].mxu0
        %v1031 = vadd.f32 %v886, %v1030
        %1032 = vdwg.mxu0
        %v1033 = vmul.f32 %v350, %v362
        %v1034 = vmul.f32 %v351, %v363
        %v1035 = vmul.f32 %v352, %v364
        %v1036 = vmul.f32 %v353, %v365
        %v1037 = vmul.f32 %v1033, %v386
        %v1038 = vmul.f32 %v1034, %v387
        %v1039 = vmul.f32 %v1035, %v388
        %v1040 = vmul.f32 %v1036, %v389
        %v1041 = vmul.f32 %v421, %v1037
        %v1042 = vmul.f32 %v420, %v1038
        %v1043 = vmul.f32 %v419, %v1039
        %v1044 = vmul.f32 %v422, %v1040
        %v1045 = vmul.f32 %v438, %v1033
        %v1046 = vmul.f32 %v437, %v1034
        %v1047 = vmul.f32 %v436, %v1035
        %v1048 = vmul.f32 %v439, %v1036
        %v1049 = vmul.f32 %v1033, %v398
        %v1050 = vmul.f32 %v1034, %v399
        %v1051 = vmul.f32 %v1035, %v400
        %v1052 = vmul.f32 %v1036, %v401
        %v1053 = vmul.f32 %v459, %v1049
        %v1054 = vmul.f32 %v458, %v1050
        %v1055 = vmul.f32 %v457, %v1051
        %v1056 = vmul.f32 %v460, %v1052
        %v1057 = vmul.f32 %v350, %v386
        %v1058 = vmul.f32 %v351, %v387
        %v1059 = vmul.f32 %v352, %v388
        %v1060 = vmul.f32 %v353, %v389
        %v1061 = vmul.f32 %v480, %v1057
        %v1062 = vmul.f32 %v479, %v1058
        %v1063 = vmul.f32 %v478, %v1059
        %v1064 = vmul.f32 %v481, %v1060
        %v1065 = vmul.f32 %v497, %v350
        %v1066 = vmul.f32 %v496, %v351
        %v1067 = vmul.f32 %v495, %v352
        %v1068 = vmul.f32 %v498, %v353
        %v1069 = vmul.f32 %v350, %v398
        %v1070 = vmul.f32 %v351, %v399
        %v1071 = vmul.f32 %v352, %v400
        %v1072 = vmul.f32 %v353, %v401
        %v1073 = vmul.f32 %v518, %v1069
        %v1074 = vmul.f32 %v517, %v1070
        %v1075 = vmul.f32 %v516, %v1071
        %v1076 = vmul.f32 %v519, %v1072
        %v1077 = vmul.f32 %v350, %v374
        %v1078 = vmul.f32 %v351, %v375
        %v1079 = vmul.f32 %v352, %v376
        %v1080 = vmul.f32 %v353, %v377
        %v1081 = vmul.f32 %v1077, %v386
        %v1082 = vmul.f32 %v1078, %v387
        %v1083 = vmul.f32 %v1079, %v388
        %v1084 = vmul.f32 %v1080, %v389
        %v1085 = vmul.f32 %v543, %v1081
        %v1086 = vmul.f32 %v542, %v1082
        %v1087 = vmul.f32 %v541, %v1083
        %v1088 = vmul.f32 %v544, %v1084
        %v1089 = vmul.f32 %v560, %v1077
        %v1090 = vmul.f32 %v559, %v1078
        %v1091 = vmul.f32 %v558, %v1079
        %v1092 = vmul.f32 %v561, %v1080
        %v1093 = vmul.f32 %v1077, %v398
        %v1094 = vmul.f32 %v1078, %v399
        %v1095 = vmul.f32 %v1079, %v400
        %v1096 = vmul.f32 %v1080, %v401
        %v1097 = vmul.f32 %v581, %v1093
        %v1098 = vmul.f32 %v580, %v1094
        %v1099 = vmul.f32 %v579, %v1095
        %v1100 = vmul.f32 %v582, %v1096
        %s1101 = scalar_lea.vmem [#allocation5], 16
        %v1102 = vld [vmem:[%s1101] sm:$0xff]
        %v1104 = vsel %vm742, %v1102, 0
        %1106 = vmatprep.subr.mxu0 %v1042
        %1107 = vmatpush1.msra.mxu0 %v1041
        %1108 = vmatprep.subr.mxu0 %v1046
        %1109 = vmatpush1.msra.mxu0 %v1045
        %1110 = vmatprep.subr.mxu0 %v1054
        %1111 = vmatpush1.msra.mxu0 %v1053
        %1112 = vmatprep.subr.mxu0 %v1062
        %1113 = vmatpush1.msra.mxu0 %v1061
        %1114 = vmatprep.subr.mxu0 %v1066
        %1115 = vmatpush1.msra.mxu0 %v1065
        %1116 = vmatprep.subr.mxu0 %v1074
        %1117 = vmatpush1.msra.mxu0 %v1073
        %1118 = vmatprep.subr.mxu0 %v1086
        %1119 = vmatpush1.msra.mxu0 %v1085
        %1120 = vmatprep.subr.mxu0 %v1090
        %1121 = vmatpush1.msra.mxu0 %v1089
        %1122 = vmatprep.subr.mxu0 %v1098
        %1123 = vmatpush1.msra.mxu0 %v1097
        %1124 = vmatprep.subr.mxu0 0.0
        %1125 = vmatpush1.msra.mxu0 0.0
        %1126 = vmatprep.subr.mxu0 0.0
        %1127 = vmatpush1.msra.mxu0 0.0
        %1128 = vmatprep.subr.mxu0 0.0
        %1129 = vmatpush1.msra.mxu0 0.0
        %1130 = vmatprep.subr.mxu0 0.0
        %1131 = vmatpush1.msra.mxu0 0.0
        %1132 = vmatprep.subr.mxu0 0.0
        %1133 = vmatpush1.msra.mxu0 0.0
        %1134 = vmatprep.subr.mxu0 0.0
        %1135 = vmatpush1.msra.mxu0 0.0
        %1136 = vmatprep.subr.mxu0 0.0
        %1137 = vmatpush1.msra.mxu0 0.0
        %1138 = vmatprep.subr.mxu0 0.0
        %1139 = vmatpush1.msra.mxu0 0.0
        %1140 = vmatprep.subr.mxu0 0.0
        %1141 = vmatpush1.msra.mxu0 0.0
        %1142 = vmatprep.subr.mxu0 0.0
        %1143 = vmatpush1.msra.mxu0 0.0
        %1144 = vmatprep.subr.mxu0 0.0
        %1145 = vmatpush1.msra.mxu0 0.0
        %1146 = vmatprep.subr.mxu0 0.0
        %1147 = vmatpush1.msra.mxu0 0.0
        %1148 = vmatprep.subr.mxu0 0.0
        %1149 = vmatpush1.msra.mxu0 0.0
        %1150 = vmatprep.subr.mxu0 0.0
        %1151 = vmatpush1.msra.mxu0 0.0
        %1152 = vmatprep.subr.mxu0 0.0
        %1153 = vmatpush1.msra.mxu0 0.0
        %1154 = vmatprep.subr.mxu0 0.0
        %1155 = vmatpush1.msra.mxu0 0.0
        %1156 = vmatprep.subr.mxu0 0.0
        %1157 = vmatpush1.msra.mxu0 0.0
        %1158 = vmatprep.subr.mxu0 0.0
        %1159 = vmatpush1.msra.mxu0 0.0
        %1160 = vmatprep.subr.mxu0 0.0
        %1161 = vmatpush1.msra.mxu0 0.0
        %1162 = vmatprep.subr.mxu0 0.0
        %1163 = vmatpush1.msra.mxu0 0.0
        %1164 = vmatprep.subr.mxu0 0.0
        %1165 = vmatpush1.msra.mxu0 0.0
        %1166 = vmatprep.subr.mxu0 0.0
        %1167 = vmatpush1.msra.mxu0 0.0
        %1168 = vmatprep.subr.mxu0 0.0
        %1169 = vmatpush1.msra.mxu0 0.0
        %1170 = vmatprep.mubr.f32.mxu0 0.0
        %1171 = vmatmul.mubr.f32.gmra.mrb[0].mxu0 %v1104
        %v1172 = vpop.f32.mrb[0].mxu0
        %v1173 = vadd.f32 0.0, %v1172
        %v1174 = vpop.f32.mrb[0].mxu0
        %v1175 = vadd.f32 0.0, %v1174
        %1176 = vdwg.mxu0
        %1177 = vmatprep.subr.mxu0 %v1044
        %1178 = vmatpush1.msra.mxu0 %v1043
        %1179 = vmatprep.subr.mxu0 %v1048
        %1180 = vmatpush1.msra.mxu0 %v1047
        %1181 = vmatprep.subr.mxu0 %v1056
        %1182 = vmatpush1.msra.mxu0 %v1055
        %1183 = vmatprep.subr.mxu0 %v1064
        %1184 = vmatpush1.msra.mxu0 %v1063
        %1185 = vmatprep.subr.mxu0 %v1068
        %1186 = vmatpush1.msra.mxu0 %v1067
        %1187 = vmatprep.subr.mxu0 %v1076
        %1188 = vmatpush1.msra.mxu0 %v1075
        %1189 = vmatprep.subr.mxu0 %v1088
        %1190 = vmatpush1.msra.mxu0 %v1087
        %1191 = vmatprep.subr.mxu0 %v1092
        %1192 = vmatpush1.msra.mxu0 %v1091
        %1193 = vmatprep.subr.mxu0 %v1100
        %1194 = vmatpush1.msra.mxu0 %v1099
        %1195 = vmatprep.subr.mxu0 0.0
        %1196 = vmatpush1.msra.mxu0 0.0
        %1197 = vmatprep.subr.mxu0 0.0
        %1198 = vmatpush1.msra.mxu0 0.0
        %1199 = vmatprep.subr.mxu0 0.0
        %1200 = vmatpush1.msra.mxu0 0.0
        %1201 = vmatprep.subr.mxu0 0.0
        %1202 = vmatpush1.msra.mxu0 0.0
        %1203 = vmatprep.subr.mxu0 0.0
        %1204 = vmatpush1.msra.mxu0 0.0
        %1205 = vmatprep.subr.mxu0 0.0
        %1206 = vmatpush1.msra.mxu0 0.0
        %1207 = vmatprep.subr.mxu0 0.0
        %1208 = vmatpush1.msra.mxu0 0.0
        %1209 = vmatprep.subr.mxu0 0.0
        %1210 = vmatpush1.msra.mxu0 0.0
        %1211 = vmatprep.subr.mxu0 0.0
        %1212 = vmatpush1.msra.mxu0 0.0
        %1213 = vmatprep.subr.mxu0 0.0
        %1214 = vmatpush1.msra.mxu0 0.0
        %1215 = vmatprep.subr.mxu0 0.0
        %1216 = vmatpush1.msra.mxu0 0.0
        %1217 = vmatprep.subr.mxu0 0.0
        %1218 = vmatpush1.msra.mxu0 0.0
        %1219 = vmatprep.subr.mxu0 0.0
        %1220 = vmatpush1.msra.mxu0 0.0
        %1221 = vmatprep.subr.mxu0 0.0
        %1222 = vmatpush1.msra.mxu0 0.0
        %1223 = vmatprep.subr.mxu0 0.0
        %1224 = vmatpush1.msra.mxu0 0.0
        %1225 = vmatprep.subr.mxu0 0.0
        %1226 = vmatpush1.msra.mxu0 0.0
        %1227 = vmatprep.subr.mxu0 0.0
        %1228 = vmatpush1.msra.mxu0 0.0
        %1229 = vmatprep.subr.mxu0 0.0
        %1230 = vmatpush1.msra.mxu0 0.0
        %1231 = vmatprep.subr.mxu0 0.0
        %1232 = vmatpush1.msra.mxu0 0.0
        %1233 = vmatprep.subr.mxu0 0.0
        %1234 = vmatpush1.msra.mxu0 0.0
        %1235 = vmatprep.subr.mxu0 0.0
        %1236 = vmatpush1.msra.mxu0 0.0
        %1237 = vmatprep.subr.mxu0 0.0
        %1238 = vmatpush1.msra.mxu0 0.0
        %1239 = vmatprep.subr.mxu0 0.0
        %1240 = vmatpush1.msra.mxu0 0.0
        %1241 = vmatprep.mubr.f32.mxu0 0.0
        %1242 = vmatmul.mubr.f32.gmra.mrb[0].mxu0 %v1104
        %v1243 = vpop.f32.mrb[0].mxu0
        %v1244 = vadd.f32 0.0, %v1243
        %v1245 = vpop.f32.mrb[0].mxu0
        %v1246 = vadd.f32 0.0, %v1245
        %1247 = vdwg.mxu0
        %v1248 = vadd.f32 %v958, %v1173
        %v1249 = vadd.f32 %v960, %v1175
        %v1250 = vadd.f32 %v1029, %v1244
        %v1251 = vadd.f32 %v1031, %v1246
        %v1252 = vld [vmem:[%s2] sm:$0xff]
        %1254 = vset.pattern.permute.xlu0 0
        %1255 = vperm.xlu0 %1254, %v1252
        %v1256 = vpop.permute.xlu0 %1255
        %v1258 = vadd.f32 %v1248, %v1256
        %v1259 = vadd.f32 %v1249, %v1256
        %v1260 = vadd.f32 %v1250, %v1256
        %v1261 = vadd.f32 %v1251, %v1256
        %1262 = vst [vmem:[%s201] sm:$0xff] %v1258
        %1263 = vst [vmem:[%s201 + $0x8] sm:$0xff] %v1259
        %1264 = vst [vmem:[%s201 + $0x10] sm:$0xff] %v1260
        %1265 = vst [vmem:[%s201 + $0x18] sm:$0xff] %v1261
        %s1266 = sand.u32 %s97, 1
        %s1267 = scalar_lea.sflag [#allocation4], %s1266
        %s1268 = sand.u32 %s97, 1
        %s1269 = smul.addr %s1268, 32
        %s1270 = scalar_lea.vmem [#allocation7], %s1269
        // Predicated region
        $region41: #{tpu_custom_call.1} parent=31 // pred_check
          %p1271 = pneg %p107
        $region42: #{tpu_custom_call.1} parent=31 // pred_check_branch
          %1273 = sbr.rel (%p1271) target = $region44
        $region43: #{tpu_custom_call.1} parent=31 // pred_region
          %s1275 = ssub.s32 512, 512
          %1276 = vsyncadd %s1267, %s1275
          %s1277 = smul.addr %s21, 4
          %s1278 = smul.addr %s1277, 128
          %s1279 = scalar_lea.hbm %s3, %s1278
          %s1281 = sshll.u32 %s1270, 4
          %s1282 = int_to_ptr.vmem [resolvable:$true] %s1281
          %1284 = dma.vmem_to_hbm [thread:$0]  %s1282, 512, %s1279, %s1267
        $region44: #{tpu_custom_call.1} parent=31 // pred_fallthru
          _
      $region32: #{tpu_custom_call.1} parent=5 // pred_fallthru
        _
      %p1285 = scmp.le.s32.totalorder 2, %s16
      // Predicated region
      $region45: #{tpu_custom_call.1} parent=5 // pred_check
        %p1286 = pneg %p1285
      $region46: #{tpu_custom_call.1} parent=5 // pred_check_branch
        %1288 = sbr.rel (%p1286) target = $region48
      $region47: #{tpu_custom_call.1} parent=5 // pred_region
        %s1289 = ssub.s32 %s16, 2
        // Predicated region
        $region49: #{tpu_custom_call.1} parent=47 // pred_check
          %p1290 = pneg %p113
        $region50: #{tpu_custom_call.1} parent=47 // pred_check_branch
          %1292 = sbr.rel (%p1290) target = $region52
        $region51: #{tpu_custom_call.1} parent=47 // pred_region
          %s1293 = sand.u32 %s98, 1
          %s1294 = scalar_lea.sflag [#allocation4], %s1293
          %s1295 = sand.u32 %s98, 1
          %s1296 = smul.addr %s1295, 32
          %s1297 = scalar_lea.vmem [#allocation7], %s1296
          %1298 = dma.done %s1294, 512
        $region52: #{tpu_custom_call.1} parent=47 // pred_fallthru
          _
      $region48: #{tpu_custom_call.1} parent=5 // pred_fallthru
        _
    $region6: #{tpu_custom_call.1} parent=1 // loop_footer
      %s20 = sadd.s32 1, %s16
    $region7: #{tpu_custom_call.1} parent=1 // loop_footer_branch
      %15 = sbr.rel target = $region3
    $region8: #{tpu_custom_call.1} parent=1 // loop_exit
      _
    %1299 = vsyncpa [#allocation3], 1
    %s1300 = scalar_lea.sflag [#allocation3], 1
    %1301 = vsyncpa %s1300, 1
    %1302 = vsyncpa [#allocation6], 1
    %1303 = vsyncpa [#allocation4], 1
    %s1304 = scalar_lea.sflag [#allocation4], 1
    %1305 = vsyncpa %s1304, 1

</llo_original>
